<compile_context>
chip_gen: v6e
topology: v6e:2x2x1
jax: 0.10.0
libtpu: 0.0.40
codegen_flags: <defaults>
</compile_context>

<pallas_src>
import numpy as np
import jax
import jax.numpy as jnp
from jax import lax
from jax.experimental import pallas as pl
from jax.experimental.pallas import tpu as pltpu

IN_CH = 9
GROUPS = 9
OUT_CH = 18                  # see TODO(synk) above
K = 3
CPG = OUT_CH // GROUPS       # output channels per group (= 2)
TAPS = K * K


def _deconv_hardsigmoid_kernel(w_ref, b_ref, x_ref, o_ref):
    # w_ref : SMEM (OUT_CH*TAPS,) -- flattened, spatially-flipped 3x3 taps; row co = ci*CPG + k
    # b_ref : SMEM (OUT_CH,)
    # x_ref : VMEM (CI_PER_STEP, H, W) -- input planes of this (batch, channel-group) step
    # o_ref : VMEM (CPG*CI_PER_STEP, H, W)
    ci_per_step, H, W = x_ref.shape
    g = pl.program_id(1)                      # channel-group step (0 when G == 1)

    # Hoisted boundary masks implementing the 1-pixel zero halo (computed once, reused
    # by every tap of every input channel).  0/1 f32 planes -> one vmul per application.
    row = lax.broadcasted_iota(jnp.int32, (H, W), 0)
    col = lax.broadcasted_iota(jnp.int32, (H, W), 1)
    not_row_first = (row > 0).astype(jnp.float32)        # zero row 0     (dh = -1 wrap)
    not_row_last = (row < H - 1).astype(jnp.float32)     # zero row H-1   (dh = +1 wrap)
    not_col_first = (col > 0).astype(jnp.float32)        # zero col 0     (dw = -1 wrap)
    not_col_last = (col < W - 1).astype(jnp.float32)     # zero col W-1   (dw = +1 wrap)

    def body(ci_local, carry):
        ci = g * ci_per_step + ci_local                  # global input channel == group id
        x = x_ref[ci_local].astype(jnp.float32)          # (H, W) plane (widen if bf16 input)

        # Only CPG (=2) accumulator planes + one shifted plane are live at a time.
        acc = [jnp.zeros((H, W), jnp.float32) for _ in range(CPG)]

        for kh in range(K):                              # 9 taps, fully unrolled
            dh = kh - 1
            if dh == 0:
                xv = x
            elif dh > 0:
                # xv[i, :] = x[i + 1, :]; zero the wrapped last row.
                xv = pltpu.roll(x, H - 1, axis=0) * not_row_last
            else:
                # xv[i, :] = x[i - 1, :]; zero the wrapped first row.
                xv = pltpu.roll(x, 1, axis=0) * not_row_first
            for kw in range(K):
                dw = kw - 1
                if dw == 0:
                    xs = xv
                elif dw > 0:
                    xs = pltpu.roll(xv, W - 1, axis=1) * not_col_last
                else:
                    xs = pltpu.roll(xv, 1, axis=1) * not_col_first
                t = kh * K + kw
                for k in range(CPG):
                    w = w_ref[ci * (CPG * TAPS) + k * TAPS + t]   # SMEM scalar
                    acc[k] = acc[k] + w * xs

        # Fused epilogue:  ((conv + bias) + 3).clamp(0, 6) / 6 ; lane-dense plane stores.
        for k in range(CPG):
            co = ci * CPG + k
            y = jnp.clip(acc[k] + (b_ref[co] + 3.0), 0.0, 6.0) * (1.0 / 6.0)
            o_ref[ci_local * CPG + k] = y.astype(o_ref.dtype)
        return carry

    # fori_loop (not a Python for) bounds the live set per iteration so Mosaic does not
    # spill the accumulators across the fully-unrolled tap code.
    lax.fori_loop(0, ci_per_step, body, 0)


def conv_transpose_hardsigmoid(x, weight, bias, *, out_dtype=jnp.float32,
                               boundary_dtype=jnp.float32, channel_group_steps=1):
    """x: (N, IN_CH, H, W); weight: (IN_CH, CPG, 3, 3) (PyTorch ConvTranspose2d layout);
    bias: (OUT_CH,).  Returns (N, OUT_CH, H, W) in `out_dtype`.

    Note: OUT_CH == 18 (not the invalid 16 of the nominal spec) -- see TODO(synk) above.
    Accumulation is always f32.  On v6e/v7x, `boundary_dtype=jnp.bfloat16` and
    `out_dtype=jnp.bfloat16` halve the HBM traffic (relaxed tolerances needed); keep the
    f32 defaults on v5e and for exact PyTorch parity.  `channel_group_steps=3` adds a
    second parallel grid axis to engage v7x's second TensorCore; leave at 1 on v5e/v6e.
    """
    N, C, H, W = x.shape
    assert C == IN_CH
    assert weight.shape == (IN_CH, CPG, K, K)
    assert bias.shape == (OUT_CH,)
    assert IN_CH % channel_group_steps == 0
    ci_per_step = IN_CH // channel_group_steps

    x = x.astype(boundary_dtype)
    # A stride-1, padding-1 transposed conv == correlation of the zero-haloed input with
    # the spatially flipped kernel; the halo is applied in-kernel (no jnp.pad round-trip).
    w_flip = weight[:, :, ::-1, ::-1].astype(jnp.float32)    # (IN_CH, CPG, 3, 3)
    w_flat = w_flip.reshape(OUT_CH * TAPS)                   # row co = ci*CPG + k, taps row-major
    bias = bias.astype(jnp.float32)

    return pl.pallas_call(
        _deconv_hardsigmoid_kernel,
        out_shape=jax.ShapeDtypeStruct((N, OUT_CH, H, W), out_dtype),
        grid=(N, channel_group_steps),
        in_specs=[
            pl.BlockSpec(memory_space=pltpu.MemorySpace.SMEM),          # weights (162,)
            pl.BlockSpec(memory_space=pltpu.MemorySpace.SMEM),          # bias (18,)
            pl.BlockSpec((None, ci_per_step, H, W), lambda n, g: (n, g, 0, 0)),
        ],
        out_specs=pl.BlockSpec((None, CPG * ci_per_step, H, W), lambda n, g: (n, g, 0, 0)),
        compiler_params=pltpu.CompilerParams(
            dimension_semantics=("parallel", "parallel")),
    )(w_flat, bias, x)


def _ref_numpy(x, weight, bias):
    """Independent scatter-form transposed-conv reference (vectorized NumPy)."""
    N, _, H, W = x.shape
    full = np.zeros((N, OUT_CH, H + K - 1, W + K - 1), np.float32)
    for ci in range(IN_CH):                                  # group g == input channel ci
        for k in range(CPG):
            co = ci * CPG + k
            for kh in range(K):
                for kw in range(K):
                    full[:, co, kh:kh + H, kw:kw + W] += weight[ci, k, kh, kw] * x[:, ci]
    y = full[:, :, 1:1 + H, 1:1 + W] + bias[None, :, None, None]   # padding=1 crop + bias
    return np.clip(y + 3.0, 0.0, 6.0) / 6.0


if __name__ == "__main__":
    key = jax.random.PRNGKey(0)
    kx, kw, kb = jax.random.split(key, 3)
    # The module's input is (1, 9, 128, 128); keep that (already small) shape so the
    # (H, W) planes stay lane-dense (W = 128) for the in-kernel rolls and stores.
    x = jax.random.normal(kx, (1, IN_CH, 128, 128), jnp.float32)
    weight = jax.random.normal(kw, (IN_CH, CPG, K, K), jnp.float32) * 0.3
    bias = jax.random.normal(kb, (OUT_CH,), jnp.float32) * 0.1

    out = jax.block_until_ready(conv_transpose_hardsigmoid(x, weight, bias))

    ref = _ref_numpy(np.asarray(x), np.asarray(weight), np.asarray(bias))
    np.testing.assert_allclose(np.asarray(out), ref, rtol=1e-5, atol=1e-5)
    print("KERNEL_OK")
</pallas_src>

<mosaic_0001>
module attributes {stable_mosaic.version = 11 : i64} {
  func.func @_deconv_hardsigmoid_kernel(%arg0: i32, %arg1: i32, %arg2: memref<162xf32, #tpu.memory_space<smem>>, %arg3: memref<18xf32, #tpu.memory_space<smem>>, %arg4: memref<1x9x128x128xf32, #tpu.memory_space<vmem>>, %arg5: memref<1x18x128x128xf32, #tpu.memory_space<vmem>>) attributes {dimension_semantics = [#tpu.dimension_semantics<parallel>, #tpu.dimension_semantics<parallel>], iteration_bounds = array<i64: 1, 1>, scalar_prefetch = 0 : i64, scratch_operands = 0 : i64, tpu.core_type = #tpu.core_type<tc>, window_params = [{transform_indices = @transform_0, window_bounds = array<i64: 162>}, {transform_indices = @transform_1, window_bounds = array<i64: 18>}, {transform_indices = @transform_2, window_bounds = array<i64: 1, 9, 128, 128>}, {transform_indices = @transform_3, window_bounds = array<i64: 1, 18, 128, 128>}]} {
    %0 = tpu.iota {dimensions = array<i32: 0>} : vector<128x128xi32>
    %1 = tpu.iota {dimensions = array<i32: 1>} : vector<128x128xi32>
    %c0_i32 = arith.constant 0 : i32
    %2 = vector.broadcast %c0_i32 : i32 to vector<128x128xi32>
    %3 = arith.cmpi sgt, %0, %2 : vector<128x128xi32>
    %4 = arith.extui %3 : vector<128x128xi1> to vector<128x128xi32>
    %5 = arith.sitofp %4 : vector<128x128xi32> to vector<128x128xf32>
    %c127_i32 = arith.constant 127 : i32
    %6 = vector.broadcast %c127_i32 : i32 to vector<128x128xi32>
    %7 = arith.cmpi slt, %0, %6 : vector<128x128xi32>
    %8 = arith.extui %7 : vector<128x128xi1> to vector<128x128xi32>
    %9 = arith.sitofp %8 : vector<128x128xi32> to vector<128x128xf32>
    %c0_i32_0 = arith.constant 0 : i32
    %10 = vector.broadcast %c0_i32_0 : i32 to vector<128x128xi32>
    %11 = arith.cmpi sgt, %1, %10 : vector<128x128xi32>
    %12 = arith.extui %11 : vector<128x128xi1> to vector<128x128xi32>
    %13 = arith.sitofp %12 : vector<128x128xi32> to vector<128x128xf32>
    %c127_i32_1 = arith.constant 127 : i32
    %14 = vector.broadcast %c127_i32_1 : i32 to vector<128x128xi32>
    %15 = arith.cmpi slt, %1, %14 : vector<128x128xi32>
    %16 = arith.extui %15 : vector<128x128xi1> to vector<128x128xi32>
    %17 = arith.sitofp %16 : vector<128x128xi32> to vector<128x128xf32>
    %c0_i32_2 = arith.constant 0 : i32
    %c9_i32 = arith.constant 9 : i32
    %18 = arith.addi %c0_i32_2, %c9_i32 : i32
    %c1_i32 = arith.constant 1 : i32
    scf.for %arg6 = %c0_i32_2 to %18 step %c1_i32  : i32 {
      %c9_i32_4 = arith.constant 9 : i32
      %19 = arith.muli %arg1, %c9_i32_4 : i32
      %20 = arith.addi %19, %arg6 : i32
      %c0 = arith.constant 0 : index
      %21 = arith.index_cast %arg6 : i32 to index
      %c0_5 = arith.constant 0 : index
      %c0_6 = arith.constant 0 : index
      %22 = vector.load %arg4[%c0, %21, %c0_5, %c0_6] : memref<1x9x128x128xf32, #tpu.memory_space<vmem>>, vector<1x1x128x128xf32>
      %23 = vector.shape_cast %22 : vector<1x1x128x128xf32> to vector<128x128xf32>
      %cst = arith.constant 0.000000e+00 : f32
      %24 = vector.broadcast %cst : f32 to vector<128x128xf32>
      %cst_7 = arith.constant 0.000000e+00 : f32
      %25 = vector.broadcast %cst_7 : f32 to vector<128x128xf32>
      %c1_i32_8 = arith.constant 1 : i32
      %26 = tpu.dynamic_rotate %23 by %c1_i32_8 dim 0 : vector<128x128xf32>, i32 -> vector<128x128xf32>
      %27 = arith.mulf %26, %5 : vector<128x128xf32>
      %c1_i32_9 = arith.constant 1 : i32
      %28 = tpu.dynamic_rotate %27 by %c1_i32_9 dim 1 : vector<128x128xf32>, i32 -> vector<128x128xf32>
      %29 = arith.mulf %28, %13 : vector<128x128xf32>
      %c18_i32 = arith.constant 18 : i32
      %30 = arith.muli %20, %c18_i32 : i32
      %c0_i32_10 = arith.constant 0 : i32
      %31 = arith.addi %30, %c0_i32_10 : i32
      %c0_i32_11 = arith.constant 0 : i32
      %32 = arith.addi %31, %c0_i32_11 : i32
      %33 = arith.index_cast %32 : i32 to index
      %34 = memref.load %arg2[%33] : memref<162xf32, #tpu.memory_space<smem>>
      %35 = vector.broadcast %34 : f32 to vector<128x128xf32>
      %36 = arith.mulf %35, %29 : vector<128x128xf32>
      %37 = arith.addf %24, %36 : vector<128x128xf32>
      %c18_i32_12 = arith.constant 18 : i32
      %38 = arith.muli %20, %c18_i32_12 : i32
      %c9_i32_13 = arith.constant 9 : i32
      %39 = arith.addi %38, %c9_i32_13 : i32
      %c0_i32_14 = arith.constant 0 : i32
      %40 = arith.addi %39, %c0_i32_14 : i32
      %41 = arith.index_cast %40 : i32 to index
      %42 = memref.load %arg2[%41] : memref<162xf32, #tpu.memory_space<smem>>
      %43 = vector.broadcast %42 : f32 to vector<128x128xf32>
      %44 = arith.mulf %43, %29 : vector<128x128xf32>
      %45 = arith.addf %25, %44 : vector<128x128xf32>
      %c18_i32_15 = arith.constant 18 : i32
      %46 = arith.muli %20, %c18_i32_15 : i32
      %c0_i32_16 = arith.constant 0 : i32
      %47 = arith.addi %46, %c0_i32_16 : i32
      %c1_i32_17 = arith.constant 1 : i32
      %48 = arith.addi %47, %c1_i32_17 : i32
      %49 = arith.index_cast %48 : i32 to index
      %50 = memref.load %arg2[%49] : memref<162xf32, #tpu.memory_space<smem>>
      %51 = vector.broadcast %50 : f32 to vector<128x128xf32>
      %52 = arith.mulf %51, %27 : vector<128x128xf32>
      %53 = arith.addf %37, %52 : vector<128x128xf32>
      %c18_i32_18 = arith.constant 18 : i32
      %54 = arith.muli %20, %c18_i32_18 : i32
      %c9_i32_19 = arith.constant 9 : i32
      %55 = arith.addi %54, %c9_i32_19 : i32
      %c1_i32_20 = arith.constant 1 : i32
      %56 = arith.addi %55, %c1_i32_20 : i32
      %57 = arith.index_cast %56 : i32 to index
      %58 = memref.load %arg2[%57] : memref<162xf32, #tpu.memory_space<smem>>
      %59 = vector.broadcast %58 : f32 to vector<128x128xf32>
      %60 = arith.mulf %59, %27 : vector<128x128xf32>
      %61 = arith.addf %45, %60 : vector<128x128xf32>
      %c127_i32_21 = arith.constant 127 : i32
      %62 = tpu.dynamic_rotate %27 by %c127_i32_21 dim 1 : vector<128x128xf32>, i32 -> vector<128x128xf32>
      %63 = arith.mulf %62, %17 : vector<128x128xf32>
      %c18_i32_22 = arith.constant 18 : i32
      %64 = arith.muli %20, %c18_i32_22 : i32
      %c0_i32_23 = arith.constant 0 : i32
      %65 = arith.addi %64, %c0_i32_23 : i32
      %c2_i32 = arith.constant 2 : i32
      %66 = arith.addi %65, %c2_i32 : i32
      %67 = arith.index_cast %66 : i32 to index
      %68 = memref.load %arg2[%67] : memref<162xf32, #tpu.memory_space<smem>>
      %69 = vector.broadcast %68 : f32 to vector<128x128xf32>
      %70 = arith.mulf %69, %63 : vector<128x128xf32>
      %71 = arith.addf %53, %70 : vector<128x128xf32>
      %c18_i32_24 = arith.constant 18 : i32
      %72 = arith.muli %20, %c18_i32_24 : i32
      %c9_i32_25 = arith.constant 9 : i32
      %73 = arith.addi %72, %c9_i32_25 : i32
      %c2_i32_26 = arith.constant 2 : i32
      %74 = arith.addi %73, %c2_i32_26 : i32
      %75 = arith.index_cast %74 : i32 to index
      %76 = memref.load %arg2[%75] : memref<162xf32, #tpu.memory_space<smem>>
      %77 = vector.broadcast %76 : f32 to vector<128x128xf32>
      %78 = arith.mulf %77, %63 : vector<128x128xf32>
      %79 = arith.addf %61, %78 : vector<128x128xf32>
      %c1_i32_27 = arith.constant 1 : i32
      %80 = tpu.dynamic_rotate %23 by %c1_i32_27 dim 1 : vector<128x128xf32>, i32 -> vector<128x128xf32>
      %81 = arith.mulf %80, %13 : vector<128x128xf32>
      %c18_i32_28 = arith.constant 18 : i32
      %82 = arith.muli %20, %c18_i32_28 : i32
      %c0_i32_29 = arith.constant 0 : i32
      %83 = arith.addi %82, %c0_i32_29 : i32
      %c3_i32 = arith.constant 3 : i32
      %84 = arith.addi %83, %c3_i32 : i32
      %85 = arith.index_cast %84 : i32 to index
      %86 = memref.load %arg2[%85] : memref<162xf32, #tpu.memory_space<smem>>
      %87 = vector.broadcast %86 : f32 to vector<128x128xf32>
      %88 = arith.mulf %87, %81 : vector<128x128xf32>
      %89 = arith.addf %71, %88 : vector<128x128xf32>
      %c18_i32_30 = arith.constant 18 : i32
      %90 = arith.muli %20, %c18_i32_30 : i32
      %c9_i32_31 = arith.constant 9 : i32
      %91 = arith.addi %90, %c9_i32_31 : i32
      %c3_i32_32 = arith.constant 3 : i32
      %92 = arith.addi %91, %c3_i32_32 : i32
      %93 = arith.index_cast %92 : i32 to index
      %94 = memref.load %arg2[%93] : memref<162xf32, #tpu.memory_space<smem>>
      %95 = vector.broadcast %94 : f32 to vector<128x128xf32>
      %96 = arith.mulf %95, %81 : vector<128x128xf32>
      %97 = arith.addf %79, %96 : vector<128x128xf32>
      %c18_i32_33 = arith.constant 18 : i32
      %98 = arith.muli %20, %c18_i32_33 : i32
      %c0_i32_34 = arith.constant 0 : i32
      %99 = arith.addi %98, %c0_i32_34 : i32
      %c4_i32 = arith.constant 4 : i32
      %100 = arith.addi %99, %c4_i32 : i32
      %101 = arith.index_cast %100 : i32 to index
      %102 = memref.load %arg2[%101] : memref<162xf32, #tpu.memory_space<smem>>
      %103 = vector.broadcast %102 : f32 to vector<128x128xf32>
      %104 = arith.mulf %103, %23 : vector<128x128xf32>
      %105 = arith.addf %89, %104 : vector<128x128xf32>
      %c18_i32_35 = arith.constant 18 : i32
      %106 = arith.muli %20, %c18_i32_35 : i32
      %c9_i32_36 = arith.constant 9 : i32
      %107 = arith.addi %106, %c9_i32_36 : i32
      %c4_i32_37 = arith.constant 4 : i32
      %108 = arith.addi %107, %c4_i32_37 : i32
      %109 = arith.index_cast %108 : i32 to index
      %110 = memref.load %arg2[%109] : memref<162xf32, #tpu.memory_space<smem>>
      %111 = vector.broadcast %110 : f32 to vector<128x128xf32>
      %112 = arith.mulf %111, %23 : vector<128x128xf32>
      %113 = arith.addf %97, %112 : vector<128x128xf32>
      %c127_i32_38 = arith.constant 127 : i32
      %114 = tpu.dynamic_rotate %23 by %c127_i32_38 dim 1 : vector<128x128xf32>, i32 -> vector<128x128xf32>
      %115 = arith.mulf %114, %17 : vector<128x128xf32>
      %c18_i32_39 = arith.constant 18 : i32
      %116 = arith.muli %20, %c18_i32_39 : i32
      %c0_i32_40 = arith.constant 0 : i32
      %117 = arith.addi %116, %c0_i32_40 : i32
      %c5_i32 = arith.constant 5 : i32
      %118 = arith.addi %117, %c5_i32 : i32
      %119 = arith.index_cast %118 : i32 to index
      %120 = memref.load %arg2[%119] : memref<162xf32, #tpu.memory_space<smem>>
      %121 = vector.broadcast %120 : f32 to vector<128x128xf32>
      %122 = arith.mulf %121, %115 : vector<128x128xf32>
      %123 = arith.addf %105, %122 : vector<128x128xf32>
      %c18_i32_41 = arith.constant 18 : i32
      %124 = arith.muli %20, %c18_i32_41 : i32
      %c9_i32_42 = arith.constant 9 : i32
      %125 = arith.addi %124, %c9_i32_42 : i32
      %c5_i32_43 = arith.constant 5 : i32
      %126 = arith.addi %125, %c5_i32_43 : i32
      %127 = arith.index_cast %126 : i32 to index
      %128 = memref.load %arg2[%127] : memref<162xf32, #tpu.memory_space<smem>>
      %129 = vector.broadcast %128 : f32 to vector<128x128xf32>
      %130 = arith.mulf %129, %115 : vector<128x128xf32>
      %131 = arith.addf %113, %130 : vector<128x128xf32>
      %c127_i32_44 = arith.constant 127 : i32
      %132 = tpu.dynamic_rotate %23 by %c127_i32_44 dim 0 : vector<128x128xf32>, i32 -> vector<128x128xf32>
      %133 = arith.mulf %132, %9 : vector<128x128xf32>
      %c1_i32_45 = arith.constant 1 : i32
      %134 = tpu.dynamic_rotate %133 by %c1_i32_45 dim 1 : vector<128x128xf32>, i32 -> vector<128x128xf32>
      %135 = arith.mulf %134, %13 : vector<128x128xf32>
      %c18_i32_46 = arith.constant 18 : i32
      %136 = arith.muli %20, %c18_i32_46 : i32
      %c0_i32_47 = arith.constant 0 : i32
      %137 = arith.addi %136, %c0_i32_47 : i32
      %c6_i32 = arith.constant 6 : i32
      %138 = arith.addi %137, %c6_i32 : i32
      %139 = arith.index_cast %138 : i32 to index
      %140 = memref.load %arg2[%139] : memref<162xf32, #tpu.memory_space<smem>>
      %141 = vector.broadcast %140 : f32 to vector<128x128xf32>
      %142 = arith.mulf %141, %135 : vector<128x128xf32>
      %143 = arith.addf %123, %142 : vector<128x128xf32>
      %c18_i32_48 = arith.constant 18 : i32
      %144 = arith.muli %20, %c18_i32_48 : i32
      %c9_i32_49 = arith.constant 9 : i32
      %145 = arith.addi %144, %c9_i32_49 : i32
      %c6_i32_50 = arith.constant 6 : i32
      %146 = arith.addi %145, %c6_i32_50 : i32
      %147 = arith.index_cast %146 : i32 to index
      %148 = memref.load %arg2[%147] : memref<162xf32, #tpu.memory_space<smem>>
      %149 = vector.broadcast %148 : f32 to vector<128x128xf32>
      %150 = arith.mulf %149, %135 : vector<128x128xf32>
      %151 = arith.addf %131, %150 : vector<128x128xf32>
      %c18_i32_51 = arith.constant 18 : i32
      %152 = arith.muli %20, %c18_i32_51 : i32
      %c0_i32_52 = arith.constant 0 : i32
      %153 = arith.addi %152, %c0_i32_52 : i32
      %c7_i32 = arith.constant 7 : i32
      %154 = arith.addi %153, %c7_i32 : i32
      %155 = arith.index_cast %154 : i32 to index
      %156 = memref.load %arg2[%155] : memref<162xf32, #tpu.memory_space<smem>>
      %157 = vector.broadcast %156 : f32 to vector<128x128xf32>
      %158 = arith.mulf %157, %133 : vector<128x128xf32>
      %159 = arith.addf %143, %158 : vector<128x128xf32>
      %c18_i32_53 = arith.constant 18 : i32
      %160 = arith.muli %20, %c18_i32_53 : i32
      %c9_i32_54 = arith.constant 9 : i32
      %161 = arith.addi %160, %c9_i32_54 : i32
      %c7_i32_55 = arith.constant 7 : i32
      %162 = arith.addi %161, %c7_i32_55 : i32
      %163 = arith.index_cast %162 : i32 to index
      %164 = memref.load %arg2[%163] : memref<162xf32, #tpu.memory_space<smem>>
      %165 = vector.broadcast %164 : f32 to vector<128x128xf32>
      %166 = arith.mulf %165, %133 : vector<128x128xf32>
      %167 = arith.addf %151, %166 : vector<128x128xf32>
      %c127_i32_56 = arith.constant 127 : i32
      %168 = tpu.dynamic_rotate %133 by %c127_i32_56 dim 1 : vector<128x128xf32>, i32 -> vector<128x128xf32>
      %169 = arith.mulf %168, %17 : vector<128x128xf32>
      %c18_i32_57 = arith.constant 18 : i32
      %170 = arith.muli %20, %c18_i32_57 : i32
      %c0_i32_58 = arith.constant 0 : i32
      %171 = arith.addi %170, %c0_i32_58 : i32
      %c8_i32 = arith.constant 8 : i32
      %172 = arith.addi %171, %c8_i32 : i32
      %173 = arith.index_cast %172 : i32 to index
      %174 = memref.load %arg2[%173] : memref<162xf32, #tpu.memory_space<smem>>
      %175 = vector.broadcast %174 : f32 to vector<128x128xf32>
      %176 = arith.mulf %175, %169 : vector<128x128xf32>
      %177 = arith.addf %159, %176 : vector<128x128xf32>
      %c18_i32_59 = arith.constant 18 : i32
      %178 = arith.muli %20, %c18_i32_59 : i32
      %c9_i32_60 = arith.constant 9 : i32
      %179 = arith.addi %178, %c9_i32_60 : i32
      %c8_i32_61 = arith.constant 8 : i32
      %180 = arith.addi %179, %c8_i32_61 : i32
      %181 = arith.index_cast %180 : i32 to index
      %182 = memref.load %arg2[%181] : memref<162xf32, #tpu.memory_space<smem>>
      %183 = vector.broadcast %182 : f32 to vector<128x128xf32>
      %184 = arith.mulf %183, %169 : vector<128x128xf32>
      %185 = arith.addf %167, %184 : vector<128x128xf32>
      %c2_i32_62 = arith.constant 2 : i32
      %186 = arith.muli %20, %c2_i32_62 : i32
      %c0_i32_63 = arith.constant 0 : i32
      %187 = arith.addi %186, %c0_i32_63 : i32
      %188 = arith.index_cast %187 : i32 to index
      %189 = memref.load %arg3[%188] : memref<18xf32, #tpu.memory_space<smem>>
      %cst_64 = arith.constant 3.000000e+00 : f32
      %190 = arith.addf %189, %cst_64 : f32
      %191 = vector.broadcast %190 : f32 to vector<128x128xf32>
      %192 = arith.addf %177, %191 : vector<128x128xf32>
      %cst_65 = arith.constant 0.000000e+00 : f32
      %cst_66 = arith.constant 6.000000e+00 : f32
      %193 = vector.broadcast %cst_65 : f32 to vector<128x128xf32>
      %194 = arith.maximumf %193, %192 : vector<128x128xf32>
      %195 = vector.broadcast %cst_66 : f32 to vector<128x128xf32>
      %196 = arith.minimumf %195, %194 : vector<128x128xf32>
      %cst_67 = arith.constant 0.166666672 : f32
      %197 = vector.broadcast %cst_67 : f32 to vector<128x128xf32>
      %198 = arith.mulf %196, %197 : vector<128x128xf32>
      %c2_i32_68 = arith.constant 2 : i32
      %199 = arith.muli %arg6, %c2_i32_68 : i32
      %c0_i32_69 = arith.constant 0 : i32
      %200 = arith.addi %199, %c0_i32_69 : i32
      %c0_70 = arith.constant 0 : index
      %201 = arith.index_cast %200 : i32 to index
      %c0_71 = arith.constant 0 : index
      %c0_72 = arith.constant 0 : index
      %202 = vector.load %arg5[%c0_70, %201, %c0_71, %c0_72] : memref<1x18x128x128xf32, #tpu.memory_space<vmem>>, vector<1x1x128x128xf32>
      %203 = vector.shape_cast %202 : vector<1x1x128x128xf32> to vector<128x128xf32>
      %204 = vector.shape_cast %198 : vector<128x128xf32> to vector<1x1x128x128xf32>
      tpu.vector_store %arg5[%c0_70, %201, %c0_71, %c0_72], %204 {strides = array<i32>} : memref<1x18x128x128xf32, #tpu.memory_space<vmem>>, vector<1x1x128x128xf32>,
      %c2_i32_73 = arith.constant 2 : i32
      %205 = arith.muli %20, %c2_i32_73 : i32
      %c1_i32_74 = arith.constant 1 : i32
      %206 = arith.addi %205, %c1_i32_74 : i32
      %207 = arith.index_cast %206 : i32 to index
      %208 = memref.load %arg3[%207] : memref<18xf32, #tpu.memory_space<smem>>
      %cst_75 = arith.constant 3.000000e+00 : f32
      %209 = arith.addf %208, %cst_75 : f32
      %210 = vector.broadcast %209 : f32 to vector<128x128xf32>
      %211 = arith.addf %185, %210 : vector<128x128xf32>
      %cst_76 = arith.constant 0.000000e+00 : f32
      %cst_77 = arith.constant 6.000000e+00 : f32
      %212 = vector.broadcast %cst_76 : f32 to vector<128x128xf32>
      %213 = arith.maximumf %212, %211 : vector<128x128xf32>
      %214 = vector.broadcast %cst_77 : f32 to vector<128x128xf32>
      %215 = arith.minimumf %214, %213 : vector<128x128xf32>
      %cst_78 = arith.constant 0.166666672 : f32
      %216 = vector.broadcast %cst_78 : f32 to vector<128x128xf32>
      %217 = arith.mulf %215, %216 : vector<128x128xf32>
      %c2_i32_79 = arith.constant 2 : i32
      %218 = arith.muli %arg6, %c2_i32_79 : i32
      %c1_i32_80 = arith.constant 1 : i32
      %219 = arith.addi %218, %c1_i32_80 : i32
      %c0_81 = arith.constant 0 : index
      %220 = arith.index_cast %219 : i32 to index
      %c0_82 = arith.constant 0 : index
      %c0_83 = arith.constant 0 : index
      %221 = vector.load %arg5[%c0_81, %220, %c0_82, %c0_83] : memref<1x18x128x128xf32, #tpu.memory_space<vmem>>, vector<1x1x128x128xf32>
      %222 = vector.shape_cast %221 : vector<1x1x128x128xf32> to vector<128x128xf32>
      %223 = vector.shape_cast %217 : vector<128x128xf32> to vector<1x1x128x128xf32>
      tpu.vector_store %arg5[%c0_81, %220, %c0_82, %c0_83], %223 {strides = array<i32>} : memref<1x18x128x128xf32, #tpu.memory_space<vmem>>, vector<1x1x128x128xf32>,
    }
    %c9_i32_3 = arith.constant 9 : i32
    return
  }
  func.func @transform_0(%arg0: i32, %arg1: i32) -> i32 {
    %c0_i32 = arith.constant 0 : i32
    %c0_i32_0 = arith.constant 0 : i32
    return %c0_i32 : i32
  }
  func.func @transform_1(%arg0: i32, %arg1: i32) -> i32 {
    %c0_i32 = arith.constant 0 : i32
    %c0_i32_0 = arith.constant 0 : i32
    return %c0_i32 : i32
  }
  func.func @transform_2(%arg0: i32, %arg1: i32) -> (i32, i32, i32, i32) {
    %c0_i32 = arith.constant 0 : i32
    %c0_i32_0 = arith.constant 0 : i32
    %c0_i32_1 = arith.constant 0 : i32
    return %arg0, %arg1, %c0_i32, %c0_i32_0 : i32, i32, i32, i32
  }
  func.func @transform_3(%arg0: i32, %arg1: i32) -> (i32, i32, i32, i32) {
    %c0_i32 = arith.constant 0 : i32
    %c0_i32_0 = arith.constant 0 : i32
    %c0_i32_1 = arith.constant 0 : i32
    return %arg0, %arg1, %c0_i32, %c0_i32_0 : i32, i32, i32, i32
  }
}

</mosaic_0001>

<llo_original>
// kernel: tpu_custom_call.1
$region0: #{tpu_custom_call.1}
  #allocation0 [shape = 'u32[]', space=smem, size = 0x4, offset = 0x4, fixed_abs, tag = 'smem constant byte address 0x4 - core index']
  #allocation1 [shape = 'u32[144,128]{1,0:T(1,128)}', space=vmem, size = 0x12000, scoped, tag = 'internal scratch']
  %s0 = inlined_call_operand.hbm [shape: f32[162], index: 0, kind: input, shape index: {}]
  %s1 = inlined_call_operand.hbm [shape: f32[18], index: 1, kind: input, shape index: {}]
  %s2 = inlined_call_operand.hbm [shape: f32[1,9,128,128], index: 2, kind: input, shape index: {}]
  %s3 = inlined_call_operand.hbm [shape: f32[1,18,128,128], index: 3, kind: output, shape index: {}]
  %s4 = sld [smem:[#allocation0]]
  $region41: #{tpu_custom_call.1} parent=0
    _
  %s6 = ssub.s32 1, %s4
  %s7 = scalar_select 0, %s6, %s4
  $region1: #{tpu_custom_call.1} parent=0
    #allocation2 [shape = 'u8[1024]{0}', space=smem, size = 0x400, scoped, tag = 'input window, operand 0, single buffered']
    #allocation3 [shape = 's32[1]{0}', space=sflag, size = 0x4, scoped, tag = 'scoped memory for tpu_custom_call.1']
    #allocation4 [shape = 's32[1]{0}', space=sflag, size = 0x4, scoped, tag = 'scoped memory for tpu_custom_call.1']
    #allocation5 [shape = 's32[1]{0}', space=sflag, size = 0x4, scoped, tag = 'scoped memory for tpu_custom_call.1']
    #allocation6 [shape = 'u8[512]{0}', space=smem, size = 0x200, scoped, tag = 'input window, operand 1, single buffered']
    #allocation7 [shape = 's32[1]{0}', space=sflag, size = 0x4, scoped, tag = 'scoped memory for tpu_custom_call.1']
    #allocation8 [shape = 'u8[589824]{0}', space=vmem, size = 0x90000, scoped, tag = 'input window, operand 2, single buffered']
    #allocation9 [shape = 'u8[1179648]{0}', space=vmem, size = 0x120000, scoped, tag = 'output window, operand 0, single buffered']
    %8 = vsyncpa [#allocation5], 0
    %9 = vsyncpa [#allocation7], 0
    %10 = vsyncpa [#allocation3], 0
    %11 = vsyncpa [#allocation4], 0
    // Predicated region
    $region2: #{tpu_custom_call.1} parent=1 // pred_check
      _
    $region3: #{tpu_custom_call.1} parent=1 // pred_check_branch
      %13 = sbr.rel (0) target = $region5
    $region4: #{tpu_custom_call.1} parent=1 // pred_region
      %s15 = ssub.s32 32, 32
      %16 = vsyncadd [#allocation5], %s15
      %19 = dma.hbm_to_smem %s0, 32, [#allocation2], [#allocation5]
    $region5: #{tpu_custom_call.1} parent=1 // pred_fallthru
      _
    // Predicated region
    $region6: #{tpu_custom_call.1} parent=1 // pred_check
      _
    $region7: #{tpu_custom_call.1} parent=1 // pred_check_branch
      %21 = sbr.rel (0) target = $region9
    $region8: #{tpu_custom_call.1} parent=1 // pred_region
      %s23 = ssub.s32 16, 16
      %24 = vsyncadd [#allocation7], %s23
      %27 = dma.hbm_to_smem %s1, 16, [#allocation6], [#allocation7]
    $region9: #{tpu_custom_call.1} parent=1 // pred_fallthru
      _
    // Predicated region
    $region10: #{tpu_custom_call.1} parent=1 // pred_check
      _
    $region11: #{tpu_custom_call.1} parent=1 // pred_check_branch
      %29 = sbr.rel (0) target = $region13
    $region12: #{tpu_custom_call.1} parent=1 // pred_region
      %s31 = ssub.s32 18432, 18432
      %32 = vsyncadd [#allocation3], %s31
      %s33 = sshll.u32 [#allocation8], 4
      %s34 = int_to_ptr.vmem [resolvable:$true] %s33
      %39 = dma.hbm_to_vmem [thread:$0]  %s2, 18432, %s34, [#allocation3], 128, 128, 8
    $region13: #{tpu_custom_call.1} parent=1 // pred_fallthru
      _
    // Predicated region
    $region14: #{tpu_custom_call.1} parent=1 // pred_check
      _
    $region15: #{tpu_custom_call.1} parent=1 // pred_check_branch
      %41 = sbr.rel (0) target = $region17
    $region16: #{tpu_custom_call.1} parent=1 // pred_region
      %42 = dma.done [#allocation5], 32
    $region17: #{tpu_custom_call.1} parent=1 // pred_fallthru
      _
    // Predicated region
    $region18: #{tpu_custom_call.1} parent=1 // pred_check
      _
    $region19: #{tpu_custom_call.1} parent=1 // pred_check_branch
      %44 = sbr.rel (0) target = $region21
    $region20: #{tpu_custom_call.1} parent=1 // pred_region
      %45 = dma.done [#allocation7], 16
    $region21: #{tpu_custom_call.1} parent=1 // pred_fallthru
      _
    // Predicated region
    $region22: #{tpu_custom_call.1} parent=1 // pred_check
      _
    $region23: #{tpu_custom_call.1} parent=1 // pred_check_branch
      %47 = sbr.rel (0) target = $region25
    $region24: #{tpu_custom_call.1} parent=1 // pred_region
      %48 = dma.done [#allocation3], 18432
    $region25: #{tpu_custom_call.1} parent=1 // pred_fallthru
      _
    %49 = sfence
    %v50 = vlaneseq
    %v51 = vshrl.u32 %v50, 7
    %v52 = vadd.s32 %v51, 8
    %v53 = vadd.s32 %v51, 16
    %v54 = vadd.s32 %v51, 24
    %v55 = vadd.s32 %v51, 32
    %v56 = vadd.s32 %v51, 40
    %v57 = vadd.s32 %v51, 48
    %v58 = vadd.s32 %v51, 56
    %v59 = vadd.s32 %v51, 64
    %v60 = vadd.s32 %v51, 72
    %v61 = vadd.s32 %v51, 80
    %v62 = vadd.s32 %v51, 88
    %v63 = vadd.s32 %v51, 96
    %v64 = vadd.s32 %v51, 104
    %v65 = vadd.s32 %v51, 112
    %v66 = vadd.s32 %v51, 120
    %v67 = vlaneseq
    %v68 = vand.u32 %v67, 127
    %vm69 = vcmp.gt.s32.totalorder %v51, 0
    %vm70 = vcmp.gt.s32.totalorder %v52, 0
    %vm71 = vcmp.gt.s32.totalorder %v53, 0
    %vm72 = vcmp.gt.s32.totalorder %v54, 0
    %vm73 = vcmp.gt.s32.totalorder %v55, 0
    %vm74 = vcmp.gt.s32.totalorder %v56, 0
    %vm75 = vcmp.gt.s32.totalorder %v57, 0
    %vm76 = vcmp.gt.s32.totalorder %v58, 0
    %vm77 = vcmp.gt.s32.totalorder %v59, 0
    %vm78 = vcmp.gt.s32.totalorder %v60, 0
    %vm79 = vcmp.gt.s32.totalorder %v61, 0
    %vm80 = vcmp.gt.s32.totalorder %v62, 0
    %vm81 = vcmp.gt.s32.totalorder %v63, 0
    %vm82 = vcmp.gt.s32.totalorder %v64, 0
    %vm83 = vcmp.gt.s32.totalorder %v65, 0
    %vm84 = vcmp.gt.s32.totalorder %v66, 0
    %v85 = vsel %vm69, 1, 0
    %v86 = vsel %vm70, 1, 0
    %v87 = vsel %vm71, 1, 0
    %v88 = vsel %vm72, 1, 0
    %v89 = vsel %vm73, 1, 0
    %v90 = vsel %vm74, 1, 0
    %v91 = vsel %vm75, 1, 0
    %v92 = vsel %vm76, 1, 0
    %v93 = vsel %vm77, 1, 0
    %v94 = vsel %vm78, 1, 0
    %v95 = vsel %vm79, 1, 0
    %v96 = vsel %vm80, 1, 0
    %v97 = vsel %vm81, 1, 0
    %v98 = vsel %vm82, 1, 0
    %v99 = vsel %vm83, 1, 0
    %v100 = vsel %vm84, 1, 0
    %v101 = vcvt.s32.f32 %v85
    %v102 = vcvt.s32.f32 %v86
    %v103 = vcvt.s32.f32 %v87
    %v104 = vcvt.s32.f32 %v88
    %v105 = vcvt.s32.f32 %v89
    %v106 = vcvt.s32.f32 %v90
    %v107 = vcvt.s32.f32 %v91
    %v108 = vcvt.s32.f32 %v92
    %v109 = vcvt.s32.f32 %v93
    %v110 = vcvt.s32.f32 %v94
    %v111 = vcvt.s32.f32 %v95
    %v112 = vcvt.s32.f32 %v96
    %v113 = vcvt.s32.f32 %v97
    %v114 = vcvt.s32.f32 %v98
    %v115 = vcvt.s32.f32 %v99
    %v116 = vcvt.s32.f32 %v100
    %vm117 = vcmp.lt.s32.totalorder %v51, 127
    %vm118 = vcmp.lt.s32.totalorder %v52, 127
    %vm119 = vcmp.lt.s32.totalorder %v53, 127
    %vm120 = vcmp.lt.s32.totalorder %v54, 127
    %vm121 = vcmp.lt.s32.totalorder %v55, 127
    %vm122 = vcmp.lt.s32.totalorder %v56, 127
    %vm123 = vcmp.lt.s32.totalorder %v57, 127
    %vm124 = vcmp.lt.s32.totalorder %v58, 127
    %vm125 = vcmp.lt.s32.totalorder %v59, 127
    %vm126 = vcmp.lt.s32.totalorder %v60, 127
    %vm127 = vcmp.lt.s32.totalorder %v61, 127
    %vm128 = vcmp.lt.s32.totalorder %v62, 127
    %vm129 = vcmp.lt.s32.totalorder %v63, 127
    %vm130 = vcmp.lt.s32.totalorder %v64, 127
    %vm131 = vcmp.lt.s32.totalorder %v65, 127
    %vm132 = vcmp.lt.s32.totalorder %v66, 127
    %v133 = vsel %vm117, 1, 0
    %v134 = vsel %vm118, 1, 0
    %v135 = vsel %vm119, 1, 0
    %v136 = vsel %vm120, 1, 0
    %v137 = vsel %vm121, 1, 0
    %v138 = vsel %vm122, 1, 0
    %v139 = vsel %vm123, 1, 0
    %v140 = vsel %vm124, 1, 0
    %v141 = vsel %vm125, 1, 0
    %v142 = vsel %vm126, 1, 0
    %v143 = vsel %vm127, 1, 0
    %v144 = vsel %vm128, 1, 0
    %v145 = vsel %vm129, 1, 0
    %v146 = vsel %vm130, 1, 0
    %v147 = vsel %vm131, 1, 0
    %v148 = vsel %vm132, 1, 0
    %v149 = vcvt.s32.f32 %v133
    %v150 = vcvt.s32.f32 %v134
    %v151 = vcvt.s32.f32 %v135
    %v152 = vcvt.s32.f32 %v136
    %v153 = vcvt.s32.f32 %v137
    %v154 = vcvt.s32.f32 %v138
    %v155 = vcvt.s32.f32 %v139
    %v156 = vcvt.s32.f32 %v140
    %v157 = vcvt.s32.f32 %v141
    %v158 = vcvt.s32.f32 %v142
    %v159 = vcvt.s32.f32 %v143
    %v160 = vcvt.s32.f32 %v144
    %v161 = vcvt.s32.f32 %v145
    %v162 = vcvt.s32.f32 %v146
    %v163 = vcvt.s32.f32 %v147
    %v164 = vcvt.s32.f32 %v148
    %vm165 = vcmp.gt.s32.totalorder %v68, 0
    %v166 = vsel %vm165, 1, 0
    %v167 = vcvt.s32.f32 %v166
    %vm168 = vcmp.lt.s32.totalorder %v68, 127
    %v169 = vsel %vm168, 1, 0
    %v170 = vcvt.s32.f32 %v169
    loop: start=0, step=1, limit=9
    $region26: #{tpu_custom_call.1} parent=1 // loop_pre_header
      _
    $region27: #{tpu_custom_call.1} parent=1 // loop_header
      %s172 = sphi 0, %s176
      %p173 = scmp.ge.s32.totalorder %s172, 9
    $region28: #{tpu_custom_call.1} parent=1 // loop_header_branch
      %175 = sbr.rel (%p173) target = $region32
    $region29: #{tpu_custom_call.1} parent=1 // loop_body
      %s177 = smul.u32 0, 9
      %s178 = sadd.s32 %s177, %s172
      %s179 = smul.u32 %s172, 128
      %s180 = scalar_lea.vmem [#allocation8], %s179
      %v181 = vld [vmem:[%s180] sm:$0xff]
      %v182 = vld [vmem:[%s180 + $0x8] sm:$0xff]
      %v183 = vld [vmem:[%s180 + $0x10] sm:$0xff]
      %v184 = vld [vmem:[%s180 + $0x18] sm:$0xff]
      %v185 = vld [vmem:[%s180 + $0x20] sm:$0xff]
      %v186 = vld [vmem:[%s180 + $0x28] sm:$0xff]
      %v187 = vld [vmem:[%s180 + $0x30] sm:$0xff]
      %v188 = vld [vmem:[%s180 + $0x38] sm:$0xff]
      %v189 = vld [vmem:[%s180 + $0x40] sm:$0xff]
      %v190 = vld [vmem:[%s180 + $0x48] sm:$0xff]
      %v191 = vld [vmem:[%s180 + $0x50] sm:$0xff]
      %v192 = vld [vmem:[%s180 + $0x58] sm:$0xff]
      %v193 = vld [vmem:[%s180 + $0x60] sm:$0xff]
      %v194 = vld [vmem:[%s180 + $0x68] sm:$0xff]
      %v195 = vld [vmem:[%s180 + $0x70] sm:$0xff]
      %v196 = vld [vmem:[%s180 + $0x78] sm:$0xff]
      %v197 = vrot.slane %v181, 7
      %v198 = vrot.slane %v182, 7
      %v199 = vrot.slane %v183, 7
      %v200 = vrot.slane %v184, 7
      %v201 = vrot.slane %v185, 7
      %v202 = vrot.slane %v186, 7
      %v203 = vrot.slane %v187, 7
      %v204 = vrot.slane %v188, 7
      %v205 = vrot.slane %v189, 7
      %v206 = vrot.slane %v190, 7
      %v207 = vrot.slane %v191, 7
      %v208 = vrot.slane %v192, 7
      %v209 = vrot.slane %v193, 7
      %v210 = vrot.slane %v194, 7
      %v211 = vrot.slane %v195, 7
      %v212 = vrot.slane %v196, 7
      %vm213 = vcmp.lt.s32.totalorder %v51, 1
      %v214 = vsel %vm213, %v211, %v212
      %v215 = vsel %vm213, %v210, %v211
      %v216 = vsel %vm213, %v209, %v210
      %v217 = vsel %vm213, %v208, %v209
      %v218 = vsel %vm213, %v207, %v208
      %v219 = vsel %vm213, %v206, %v207
      %v220 = vsel %vm213, %v205, %v206
      %v221 = vsel %vm213, %v204, %v205
      %v222 = vsel %vm213, %v203, %v204
      %v223 = vsel %vm213, %v202, %v203
      %v224 = vsel %vm213, %v201, %v202
      %v225 = vsel %vm213, %v200, %v201
      %v226 = vsel %vm213, %v199, %v200
      %v227 = vsel %vm213, %v198, %v199
      %v228 = vsel %vm213, %v197, %v198
      %v229 = vsel %vm213, %v212, %v197
      %v230 = vmul.f32 %v229, %v101
      %v231 = vmul.f32 %v228, %v102
      %v232 = vmul.f32 %v227, %v103
      %v233 = vmul.f32 %v226, %v104
      %v234 = vmul.f32 %v225, %v105
      %v235 = vmul.f32 %v224, %v106
      %v236 = vmul.f32 %v223, %v107
      %v237 = vmul.f32 %v222, %v108
      %v238 = vmul.f32 %v221, %v109
      %v239 = vmul.f32 %v220, %v110
      %v240 = vmul.f32 %v219, %v111
      %v241 = vmul.f32 %v218, %v112
      %v242 = vmul.f32 %v217, %v113
      %v243 = vmul.f32 %v216, %v114
      %v244 = vmul.f32 %v215, %v115
      %v245 = vmul.f32 %v214, %v116
      %246 = vrot.lane.b32.xlu0 %v230, 1
      %v247 = vpop.permute.xlu0 %246
      %248 = vrot.lane.b32.xlu0 %v231, 1
      %v249 = vpop.permute.xlu0 %248
      %250 = vrot.lane.b32.xlu0 %v232, 1
      %v251 = vpop.permute.xlu0 %250
      %252 = vrot.lane.b32.xlu0 %v233, 1
      %v253 = vpop.permute.xlu0 %252
      %254 = vrot.lane.b32.xlu0 %v234, 1
      %v255 = vpop.permute.xlu0 %254
      %256 = vrot.lane.b32.xlu0 %v235, 1
      %v257 = vpop.permute.xlu0 %256
      %258 = vrot.lane.b32.xlu0 %v236, 1
      %v259 = vpop.permute.xlu0 %258
      %260 = vrot.lane.b32.xlu0 %v237, 1
      %v261 = vpop.permute.xlu0 %260
      %262 = vrot.lane.b32.xlu0 %v238, 1
      %v263 = vpop.permute.xlu0 %262
      %264 = vrot.lane.b32.xlu0 %v239, 1
      %v265 = vpop.permute.xlu0 %264
      %266 = vrot.lane.b32.xlu0 %v240, 1
      %v267 = vpop.permute.xlu0 %266
      %268 = vrot.lane.b32.xlu0 %v241, 1
      %v269 = vpop.permute.xlu0 %268
      %270 = vrot.lane.b32.xlu0 %v242, 1
      %v271 = vpop.permute.xlu0 %270
      %272 = vrot.lane.b32.xlu0 %v243, 1
      %v273 = vpop.permute.xlu0 %272
      %274 = vrot.lane.b32.xlu0 %v244, 1
      %v275 = vpop.permute.xlu0 %274
      %276 = vrot.lane.b32.xlu0 %v245, 1
      %v277 = vpop.permute.xlu0 %276
      %v278 = vmul.f32 %v247, %v167
      %v279 = vmul.f32 %v249, %v167
      %v280 = vmul.f32 %v251, %v167
      %v281 = vmul.f32 %v253, %v167
      %v282 = vmul.f32 %v255, %v167
      %v283 = vmul.f32 %v257, %v167
      %v284 = vmul.f32 %v259, %v167
      %v285 = vmul.f32 %v261, %v167
      %v286 = vmul.f32 %v263, %v167
      %v287 = vmul.f32 %v265, %v167
      %v288 = vmul.f32 %v267, %v167
      %v289 = vmul.f32 %v269, %v167
      %v290 = vmul.f32 %v271, %v167
      %v291 = vmul.f32 %v273, %v167
      %v292 = vmul.f32 %v275, %v167
      %v293 = vmul.f32 %v277, %v167
      %s294 = smul.u32 %s178, 18
      %s295 = sld [smem:[#allocation2 + %s294]]
      %v296 = vstv %s295
      %v297 = vmul.f32 %v296, %v278
      %v298 = vmul.f32 %v296, %v279
      %v299 = vmul.f32 %v296, %v280
      %v300 = vmul.f32 %v296, %v281
      %v301 = vmul.f32 %v296, %v282
      %v302 = vmul.f32 %v296, %v283
      %v303 = vmul.f32 %v296, %v284
      %v304 = vmul.f32 %v296, %v285
      %v305 = vmul.f32 %v296, %v286
      %v306 = vmul.f32 %v296, %v287
      %v307 = vmul.f32 %v296, %v288
      %v308 = vmul.f32 %v296, %v289
      %v309 = vmul.f32 %v296, %v290
      %v310 = vmul.f32 %v296, %v291
      %v311 = vmul.f32 %v296, %v292
      %v312 = vmul.f32 %v296, %v293
      %v313 = vadd.f32 %v297, 0.0
      %v314 = vadd.f32 %v298, 0.0
      %v315 = vadd.f32 %v299, 0.0
      %v316 = vadd.f32 %v300, 0.0
      %v317 = vadd.f32 %v301, 0.0
      %v318 = vadd.f32 %v302, 0.0
      %v319 = vadd.f32 %v303, 0.0
      %v320 = vadd.f32 %v304, 0.0
      %v321 = vadd.f32 %v305, 0.0
      %v322 = vadd.f32 %v306, 0.0
      %v323 = vadd.f32 %v307, 0.0
      %v324 = vadd.f32 %v308, 0.0
      %v325 = vadd.f32 %v309, 0.0
      %v326 = vadd.f32 %v310, 0.0
      %v327 = vadd.f32 %v311, 0.0
      %v328 = vadd.f32 %v312, 0.0
      %s329 = sadd.s32 %s294, 9
      %s330 = sld [smem:[#allocation2 + %s329]]
      %v331 = vstv %s330
      %v332 = vmul.f32 %v331, %v278
      %v333 = vmul.f32 %v331, %v279
      %v334 = vmul.f32 %v331, %v280
      %v335 = vmul.f32 %v331, %v281
      %v336 = vmul.f32 %v331, %v282
      %v337 = vmul.f32 %v331, %v283
      %v338 = vmul.f32 %v331, %v284
      %v339 = vmul.f32 %v331, %v285
      %v340 = vmul.f32 %v331, %v286
      %v341 = vmul.f32 %v331, %v287
      %v342 = vmul.f32 %v331, %v288
      %v343 = vmul.f32 %v331, %v289
      %v344 = vmul.f32 %v331, %v290
      %v345 = vmul.f32 %v331, %v291
      %v346 = vmul.f32 %v331, %v292
      %v347 = vmul.f32 %v331, %v293
      %v348 = vadd.f32 %v332, 0.0
      %v349 = vadd.f32 %v333, 0.0
      %v350 = vadd.f32 %v334, 0.0
      %v351 = vadd.f32 %v335, 0.0
      %v352 = vadd.f32 %v336, 0.0
      %v353 = vadd.f32 %v337, 0.0
      %v354 = vadd.f32 %v338, 0.0
      %v355 = vadd.f32 %v339, 0.0
      %v356 = vadd.f32 %v340, 0.0
      %v357 = vadd.f32 %v341, 0.0
      %v358 = vadd.f32 %v342, 0.0
      %v359 = vadd.f32 %v343, 0.0
      %v360 = vadd.f32 %v344, 0.0
      %v361 = vadd.f32 %v345, 0.0
      %v362 = vadd.f32 %v346, 0.0
      %v363 = vadd.f32 %v347, 0.0
      %s364 = sadd.s32 %s294, 1
      %s365 = sld [smem:[#allocation2 + %s364]]
      %v366 = vstv %s365
      %v367 = vmul.f32 %v366, %v230
      %v368 = vmul.f32 %v366, %v231
      %v369 = vmul.f32 %v366, %v232
      %v370 = vmul.f32 %v366, %v233
      %v371 = vmul.f32 %v366, %v234
      %v372 = vmul.f32 %v366, %v235
      %v373 = vmul.f32 %v366, %v236
      %v374 = vmul.f32 %v366, %v237
      %v375 = vmul.f32 %v366, %v238
      %v376 = vmul.f32 %v366, %v239
      %v377 = vmul.f32 %v366, %v240
      %v378 = vmul.f32 %v366, %v241
      %v379 = vmul.f32 %v366, %v242
      %v380 = vmul.f32 %v366, %v243
      %v381 = vmul.f32 %v366, %v244
      %v382 = vmul.f32 %v366, %v245
      %v383 = vadd.f32 %v313, %v367
      %v384 = vadd.f32 %v314, %v368
      %v385 = vadd.f32 %v315, %v369
      %v386 = vadd.f32 %v316, %v370
      %v387 = vadd.f32 %v317, %v371
      %v388 = vadd.f32 %v318, %v372
      %v389 = vadd.f32 %v319, %v373
      %v390 = vadd.f32 %v320, %v374
      %v391 = vadd.f32 %v321, %v375
      %v392 = vadd.f32 %v322, %v376
      %v393 = vadd.f32 %v323, %v377
      %v394 = vadd.f32 %v324, %v378
      %v395 = vadd.f32 %v325, %v379
      %v396 = vadd.f32 %v326, %v380
      %v397 = vadd.f32 %v327, %v381
      %v398 = vadd.f32 %v328, %v382
      %s399 = sadd.s32 %s294, 10
      %s400 = sld [smem:[#allocation2 + %s399]]
      %v401 = vstv %s400
      %v402 = vmul.f32 %v401, %v230
      %v403 = vmul.f32 %v401, %v231
      %v404 = vmul.f32 %v401, %v232
      %v405 = vmul.f32 %v401, %v233
      %v406 = vmul.f32 %v401, %v234
      %v407 = vmul.f32 %v401, %v235
      %v408 = vmul.f32 %v401, %v236
      %v409 = vmul.f32 %v401, %v237
      %v410 = vmul.f32 %v401, %v238
      %v411 = vmul.f32 %v401, %v239
      %v412 = vmul.f32 %v401, %v240
      %v413 = vmul.f32 %v401, %v241
      %v414 = vmul.f32 %v401, %v242
      %v415 = vmul.f32 %v401, %v243
      %v416 = vmul.f32 %v401, %v244
      %v417 = vmul.f32 %v401, %v245
      %v418 = vadd.f32 %v348, %v402
      %v419 = vadd.f32 %v349, %v403
      %v420 = vadd.f32 %v350, %v404
      %v421 = vadd.f32 %v351, %v405
      %v422 = vadd.f32 %v352, %v406
      %v423 = vadd.f32 %v353, %v407
      %v424 = vadd.f32 %v354, %v408
      %v425 = vadd.f32 %v355, %v409
      %v426 = vadd.f32 %v356, %v410
      %v427 = vadd.f32 %v357, %v411
      %v428 = vadd.f32 %v358, %v412
      %v429 = vadd.f32 %v359, %v413
      %v430 = vadd.f32 %v360, %v414
      %v431 = vadd.f32 %v361, %v415
      %v432 = vadd.f32 %v362, %v416
      %v433 = vadd.f32 %v363, %v417
      %434 = vrot.lane.b32.xlu0 %v230, 127
      %v435 = vpop.permute.xlu0 %434
      %436 = vrot.lane.b32.xlu0 %v231, 127
      %v437 = vpop.permute.xlu0 %436
      %438 = vrot.lane.b32.xlu0 %v232, 127
      %v439 = vpop.permute.xlu0 %438
      %440 = vrot.lane.b32.xlu0 %v233, 127
      %v441 = vpop.permute.xlu0 %440
      %442 = vrot.lane.b32.xlu0 %v234, 127
      %v443 = vpop.permute.xlu0 %442
      %444 = vrot.lane.b32.xlu0 %v235, 127
      %v445 = vpop.permute.xlu0 %444
      %446 = vrot.lane.b32.xlu0 %v236, 127
      %v447 = vpop.permute.xlu0 %446
      %448 = vrot.lane.b32.xlu0 %v237, 127
      %v449 = vpop.permute.xlu0 %448
      %450 = vrot.lane.b32.xlu0 %v238, 127
      %v451 = vpop.permute.xlu0 %450
      %452 = vrot.lane.b32.xlu0 %v239, 127
      %v453 = vpop.permute.xlu0 %452
      %454 = vrot.lane.b32.xlu0 %v240, 127
      %v455 = vpop.permute.xlu0 %454
      %456 = vrot.lane.b32.xlu0 %v241, 127
      %v457 = vpop.permute.xlu0 %456
      %458 = vrot.lane.b32.xlu0 %v242, 127
      %v459 = vpop.permute.xlu0 %458
      %460 = vrot.lane.b32.xlu0 %v243, 127
      %v461 = vpop.permute.xlu0 %460
      %462 = vrot.lane.b32.xlu0 %v244, 127
      %v463 = vpop.permute.xlu0 %462
      %464 = vrot.lane.b32.xlu0 %v245, 127
      %v465 = vpop.permute.xlu0 %464
      %v466 = vmul.f32 %v435, %v170
      %v467 = vmul.f32 %v437, %v170
      %v468 = vmul.f32 %v439, %v170
      %v469 = vmul.f32 %v441, %v170
      %v470 = vmul.f32 %v443, %v170
      %v471 = vmul.f32 %v445, %v170
      %v472 = vmul.f32 %v447, %v170
      %v473 = vmul.f32 %v449, %v170
      %v474 = vmul.f32 %v451, %v170
      %v475 = vmul.f32 %v453, %v170
      %v476 = vmul.f32 %v455, %v170
      %v477 = vmul.f32 %v457, %v170
      %v478 = vmul.f32 %v459, %v170
      %v479 = vmul.f32 %v461, %v170
      %v480 = vmul.f32 %v463, %v170
      %v481 = vmul.f32 %v465, %v170
      %s482 = sadd.s32 %s294, 2
      %s483 = sld [smem:[#allocation2 + %s482]]
      %v484 = vstv %s483
      %v485 = vmul.f32 %v484, %v466
      %v486 = vmul.f32 %v484, %v467
      %v487 = vmul.f32 %v484, %v468
      %v488 = vmul.f32 %v484, %v469
      %v489 = vmul.f32 %v484, %v470
      %v490 = vmul.f32 %v484, %v471
      %v491 = vmul.f32 %v484, %v472
      %v492 = vmul.f32 %v484, %v473
      %v493 = vmul.f32 %v484, %v474
      %v494 = vmul.f32 %v484, %v475
      %v495 = vmul.f32 %v484, %v476
      %v496 = vmul.f32 %v484, %v477
      %v497 = vmul.f32 %v484, %v478
      %v498 = vmul.f32 %v484, %v479
      %v499 = vmul.f32 %v484, %v480
      %v500 = vmul.f32 %v484, %v481
      %v501 = vadd.f32 %v383, %v485
      %v502 = vadd.f32 %v384, %v486
      %v503 = vadd.f32 %v385, %v487
      %v504 = vadd.f32 %v386, %v488
      %v505 = vadd.f32 %v387, %v489
      %v506 = vadd.f32 %v388, %v490
      %v507 = vadd.f32 %v389, %v491
      %v508 = vadd.f32 %v390, %v492
      %v509 = vadd.f32 %v391, %v493
      %v510 = vadd.f32 %v392, %v494
      %v511 = vadd.f32 %v393, %v495
      %v512 = vadd.f32 %v394, %v496
      %v513 = vadd.f32 %v395, %v497
      %v514 = vadd.f32 %v396, %v498
      %v515 = vadd.f32 %v397, %v499
      %v516 = vadd.f32 %v398, %v500
      %s517 = sadd.s32 %s294, 11
      %s518 = sld [smem:[#allocation2 + %s517]]
      %v519 = vstv %s518
      %v520 = vmul.f32 %v519, %v466
      %v521 = vmul.f32 %v519, %v467
      %v522 = vmul.f32 %v519, %v468
      %v523 = vmul.f32 %v519, %v469
      %v524 = vmul.f32 %v519, %v470
      %v525 = vmul.f32 %v519, %v471
      %v526 = vmul.f32 %v519, %v472
      %v527 = vmul.f32 %v519, %v473
      %v528 = vmul.f32 %v519, %v474
      %v529 = vmul.f32 %v519, %v475
      %v530 = vmul.f32 %v519, %v476
      %v531 = vmul.f32 %v519, %v477
      %v532 = vmul.f32 %v519, %v478
      %v533 = vmul.f32 %v519, %v479
      %v534 = vmul.f32 %v519, %v480
      %v535 = vmul.f32 %v519, %v481
      %v536 = vadd.f32 %v418, %v520
      %v537 = vadd.f32 %v419, %v521
      %v538 = vadd.f32 %v420, %v522
      %v539 = vadd.f32 %v421, %v523
      %v540 = vadd.f32 %v422, %v524
      %v541 = vadd.f32 %v423, %v525
      %v542 = vadd.f32 %v424, %v526
      %v543 = vadd.f32 %v425, %v527
      %v544 = vadd.f32 %v426, %v528
      %v545 = vadd.f32 %v427, %v529
      %v546 = vadd.f32 %v428, %v530
      %v547 = vadd.f32 %v429, %v531
      %v548 = vadd.f32 %v430, %v532
      %v549 = vadd.f32 %v431, %v533
      %v550 = vadd.f32 %v432, %v534
      %v551 = vadd.f32 %v433, %v535
      %552 = vrot.lane.b32.xlu0 %v181, 1
      %v553 = vpop.permute.xlu0 %552
      %554 = vrot.lane.b32.xlu0 %v182, 1
      %v555 = vpop.permute.xlu0 %554
      %556 = vrot.lane.b32.xlu0 %v183, 1
      %v557 = vpop.permute.xlu0 %556
      %558 = vrot.lane.b32.xlu0 %v184, 1
      %v559 = vpop.permute.xlu0 %558
      %560 = vrot.lane.b32.xlu0 %v185, 1
      %v561 = vpop.permute.xlu0 %560
      %562 = vrot.lane.b32.xlu0 %v186, 1
      %v563 = vpop.permute.xlu0 %562
      %564 = vrot.lane.b32.xlu0 %v187, 1
      %v565 = vpop.permute.xlu0 %564
      %566 = vrot.lane.b32.xlu0 %v188, 1
      %v567 = vpop.permute.xlu0 %566
      %568 = vrot.lane.b32.xlu0 %v189, 1
      %v569 = vpop.permute.xlu0 %568
      %570 = vrot.lane.b32.xlu0 %v190, 1
      %v571 = vpop.permute.xlu0 %570
      %572 = vrot.lane.b32.xlu0 %v191, 1
      %v573 = vpop.permute.xlu0 %572
      %574 = vrot.lane.b32.xlu0 %v192, 1
      %v575 = vpop.permute.xlu0 %574
      %576 = vrot.lane.b32.xlu0 %v193, 1
      %v577 = vpop.permute.xlu0 %576
      %578 = vrot.lane.b32.xlu0 %v194, 1
      %v579 = vpop.permute.xlu0 %578
      %580 = vrot.lane.b32.xlu0 %v195, 1
      %v581 = vpop.permute.xlu0 %580
      %582 = vrot.lane.b32.xlu0 %v196, 1
      %v583 = vpop.permute.xlu0 %582
      %v584 = vmul.f32 %v553, %v167
      %v585 = vmul.f32 %v555, %v167
      %v586 = vmul.f32 %v557, %v167
      %v587 = vmul.f32 %v559, %v167
      %v588 = vmul.f32 %v561, %v167
      %v589 = vmul.f32 %v563, %v167
      %v590 = vmul.f32 %v565, %v167
      %v591 = vmul.f32 %v567, %v167
      %v592 = vmul.f32 %v569, %v167
      %v593 = vmul.f32 %v571, %v167
      %v594 = vmul.f32 %v573, %v167
      %v595 = vmul.f32 %v575, %v167
      %v596 = vmul.f32 %v577, %v167
      %v597 = vmul.f32 %v579, %v167
      %v598 = vmul.f32 %v581, %v167
      %v599 = vmul.f32 %v583, %v167
      %s600 = sadd.s32 %s294, 3
      %s601 = sld [smem:[#allocation2 + %s600]]
      %v602 = vstv %s601
      %v603 = vmul.f32 %v602, %v584
      %v604 = vmul.f32 %v602, %v585
      %v605 = vmul.f32 %v602, %v586
      %v606 = vmul.f32 %v602, %v587
      %v607 = vmul.f32 %v602, %v588
      %v608 = vmul.f32 %v602, %v589
      %v609 = vmul.f32 %v602, %v590
      %v610 = vmul.f32 %v602, %v591
      %v611 = vmul.f32 %v602, %v592
      %v612 = vmul.f32 %v602, %v593
      %v613 = vmul.f32 %v602, %v594
      %v614 = vmul.f32 %v602, %v595
      %v615 = vmul.f32 %v602, %v596
      %v616 = vmul.f32 %v602, %v597
      %v617 = vmul.f32 %v602, %v598
      %v618 = vmul.f32 %v602, %v599
      %v619 = vadd.f32 %v501, %v603
      %v620 = vadd.f32 %v502, %v604
      %v621 = vadd.f32 %v503, %v605
      %v622 = vadd.f32 %v504, %v606
      %v623 = vadd.f32 %v505, %v607
      %v624 = vadd.f32 %v506, %v608
      %v625 = vadd.f32 %v507, %v609
      %v626 = vadd.f32 %v508, %v610
      %v627 = vadd.f32 %v509, %v611
      %v628 = vadd.f32 %v510, %v612
      %v629 = vadd.f32 %v511, %v613
      %v630 = vadd.f32 %v512, %v614
      %v631 = vadd.f32 %v513, %v615
      %v632 = vadd.f32 %v514, %v616
      %v633 = vadd.f32 %v515, %v617
      %v634 = vadd.f32 %v516, %v618
      %s635 = sadd.s32 %s294, 12
      %s636 = sld [smem:[#allocation2 + %s635]]
      %v637 = vstv %s636
      %v638 = vmul.f32 %v637, %v584
      %v639 = vmul.f32 %v637, %v585
      %v640 = vmul.f32 %v637, %v586
      %v641 = vmul.f32 %v637, %v587
      %v642 = vmul.f32 %v637, %v588
      %v643 = vmul.f32 %v637, %v589
      %v644 = vmul.f32 %v637, %v590
      %v645 = vmul.f32 %v637, %v591
      %v646 = vmul.f32 %v637, %v592
      %v647 = vmul.f32 %v637, %v593
      %v648 = vmul.f32 %v637, %v594
      %v649 = vmul.f32 %v637, %v595
      %v650 = vmul.f32 %v637, %v596
      %v651 = vmul.f32 %v637, %v597
      %v652 = vmul.f32 %v637, %v598
      %v653 = vmul.f32 %v637, %v599
      %v654 = vadd.f32 %v536, %v638
      %v655 = vadd.f32 %v537, %v639
      %v656 = vadd.f32 %v538, %v640
      %v657 = vadd.f32 %v539, %v641
      %v658 = vadd.f32 %v540, %v642
      %v659 = vadd.f32 %v541, %v643
      %v660 = vadd.f32 %v542, %v644
      %v661 = vadd.f32 %v543, %v645
      %v662 = vadd.f32 %v544, %v646
      %v663 = vadd.f32 %v545, %v647
      %v664 = vadd.f32 %v546, %v648
      %v665 = vadd.f32 %v547, %v649
      %v666 = vadd.f32 %v548, %v650
      %v667 = vadd.f32 %v549, %v651
      %v668 = vadd.f32 %v550, %v652
      %v669 = vadd.f32 %v551, %v653
      %s670 = sadd.s32 %s294, 4
      %s671 = sld [smem:[#allocation2 + %s670]]
      %v672 = vstv %s671
      %v673 = vmul.f32 %v672, %v181
      %v674 = vmul.f32 %v672, %v182
      %v675 = vmul.f32 %v672, %v183
      %v676 = vmul.f32 %v672, %v184
      %v677 = vmul.f32 %v672, %v185
      %v678 = vmul.f32 %v672, %v186
      %v679 = vmul.f32 %v672, %v187
      %v680 = vmul.f32 %v672, %v188
      %v681 = vmul.f32 %v672, %v189
      %v682 = vmul.f32 %v672, %v190
      %v683 = vmul.f32 %v672, %v191
      %v684 = vmul.f32 %v672, %v192
      %v685 = vmul.f32 %v672, %v193
      %v686 = vmul.f32 %v672, %v194
      %v687 = vmul.f32 %v672, %v195
      %v688 = vmul.f32 %v672, %v196
      %v689 = vadd.f32 %v619, %v673
      %v690 = vadd.f32 %v620, %v674
      %v691 = vadd.f32 %v621, %v675
      %v692 = vadd.f32 %v622, %v676
      %v693 = vadd.f32 %v623, %v677
      %v694 = vadd.f32 %v624, %v678
      %v695 = vadd.f32 %v625, %v679
      %v696 = vadd.f32 %v626, %v680
      %v697 = vadd.f32 %v627, %v681
      %v698 = vadd.f32 %v628, %v682
      %v699 = vadd.f32 %v629, %v683
      %v700 = vadd.f32 %v630, %v684
      %v701 = vadd.f32 %v631, %v685
      %v702 = vadd.f32 %v632, %v686
      %v703 = vadd.f32 %v633, %v687
      %v704 = vadd.f32 %v634, %v688
      %s705 = sadd.s32 %s294, 13
      %s706 = sld [smem:[#allocation2 + %s705]]
      %v707 = vstv %s706
      %v708 = vmul.f32 %v707, %v181
      %v709 = vmul.f32 %v707, %v182
      %v710 = vmul.f32 %v707, %v183
      %v711 = vmul.f32 %v707, %v184
      %v712 = vmul.f32 %v707, %v185
      %v713 = vmul.f32 %v707, %v186
      %v714 = vmul.f32 %v707, %v187
      %v715 = vmul.f32 %v707, %v188
      %v716 = vmul.f32 %v707, %v189
      %v717 = vmul.f32 %v707, %v190
      %v718 = vmul.f32 %v707, %v191
      %v719 = vmul.f32 %v707, %v192
      %v720 = vmul.f32 %v707, %v193
      %v721 = vmul.f32 %v707, %v194
      %v722 = vmul.f32 %v707, %v195
      %v723 = vmul.f32 %v707, %v196
      %v724 = vadd.f32 %v654, %v708
      %v725 = vadd.f32 %v655, %v709
      %v726 = vadd.f32 %v656, %v710
      %v727 = vadd.f32 %v657, %v711
      %v728 = vadd.f32 %v658, %v712
      %v729 = vadd.f32 %v659, %v713
      %v730 = vadd.f32 %v660, %v714
      %v731 = vadd.f32 %v661, %v715
      %v732 = vadd.f32 %v662, %v716
      %v733 = vadd.f32 %v663, %v717
      %v734 = vadd.f32 %v664, %v718
      %v735 = vadd.f32 %v665, %v719
      %v736 = vadd.f32 %v666, %v720
      %v737 = vadd.f32 %v667, %v721
      %v738 = vadd.f32 %v668, %v722
      %v739 = vadd.f32 %v669, %v723
      %740 = vrot.lane.b32.xlu0 %v181, 127
      %v741 = vpop.permute.xlu0 %740
      %742 = vrot.lane.b32.xlu0 %v182, 127
      %v743 = vpop.permute.xlu0 %742
      %744 = vrot.lane.b32.xlu0 %v183, 127
      %v745 = vpop.permute.xlu0 %744
      %746 = vrot.lane.b32.xlu0 %v184, 127
      %v747 = vpop.permute.xlu0 %746
      %748 = vrot.lane.b32.xlu0 %v185, 127
      %v749 = vpop.permute.xlu0 %748
      %750 = vrot.lane.b32.xlu0 %v186, 127
      %v751 = vpop.permute.xlu0 %750
      %752 = vrot.lane.b32.xlu0 %v187, 127
      %v753 = vpop.permute.xlu0 %752
      %754 = vrot.lane.b32.xlu0 %v188, 127
      %v755 = vpop.permute.xlu0 %754
      %756 = vrot.lane.b32.xlu0 %v189, 127
      %v757 = vpop.permute.xlu0 %756
      %758 = vrot.lane.b32.xlu0 %v190, 127
      %v759 = vpop.permute.xlu0 %758
      %760 = vrot.lane.b32.xlu0 %v191, 127
      %v761 = vpop.permute.xlu0 %760
      %762 = vrot.lane.b32.xlu0 %v192, 127
      %v763 = vpop.permute.xlu0 %762
      %764 = vrot.lane.b32.xlu0 %v193, 127
      %v765 = vpop.permute.xlu0 %764
      %766 = vrot.lane.b32.xlu0 %v194, 127
      %v767 = vpop.permute.xlu0 %766
      %768 = vrot.lane.b32.xlu0 %v195, 127
      %v769 = vpop.permute.xlu0 %768
      %770 = vrot.lane.b32.xlu0 %v196, 127
      %v771 = vpop.permute.xlu0 %770
      %v772 = vmul.f32 %v741, %v170
      %v773 = vmul.f32 %v743, %v170
      %v774 = vmul.f32 %v745, %v170
      %v775 = vmul.f32 %v747, %v170
      %v776 = vmul.f32 %v749, %v170
      %v777 = vmul.f32 %v751, %v170
      %v778 = vmul.f32 %v753, %v170
      %v779 = vmul.f32 %v755, %v170
      %v780 = vmul.f32 %v757, %v170
      %v781 = vmul.f32 %v759, %v170
      %v782 = vmul.f32 %v761, %v170
      %v783 = vmul.f32 %v763, %v170
      %v784 = vmul.f32 %v765, %v170
      %v785 = vmul.f32 %v767, %v170
      %v786 = vmul.f32 %v769, %v170
      %v787 = vmul.f32 %v771, %v170
      %s788 = sadd.s32 %s294, 5
      %s789 = sld [smem:[#allocation2 + %s788]]
      %v790 = vstv %s789
      %v791 = vmul.f32 %v790, %v772
      %v792 = vmul.f32 %v790, %v773
      %v793 = vmul.f32 %v790, %v774
      %v794 = vmul.f32 %v790, %v775
      %v795 = vmul.f32 %v790, %v776
      %v796 = vmul.f32 %v790, %v777
      %v797 = vmul.f32 %v790, %v778
      %v798 = vmul.f32 %v790, %v779
      %v799 = vmul.f32 %v790, %v780
      %v800 = vmul.f32 %v790, %v781
      %v801 = vmul.f32 %v790, %v782
      %v802 = vmul.f32 %v790, %v783
      %v803 = vmul.f32 %v790, %v784
      %v804 = vmul.f32 %v790, %v785
      %v805 = vmul.f32 %v790, %v786
      %v806 = vmul.f32 %v790, %v787
      %v807 = vadd.f32 %v689, %v791
      %v808 = vadd.f32 %v690, %v792
      %v809 = vadd.f32 %v691, %v793
      %v810 = vadd.f32 %v692, %v794
      %v811 = vadd.f32 %v693, %v795
      %v812 = vadd.f32 %v694, %v796
      %v813 = vadd.f32 %v695, %v797
      %v814 = vadd.f32 %v696, %v798
      %v815 = vadd.f32 %v697, %v799
      %v816 = vadd.f32 %v698, %v800
      %v817 = vadd.f32 %v699, %v801
      %v818 = vadd.f32 %v700, %v802
      %v819 = vadd.f32 %v701, %v803
      %v820 = vadd.f32 %v702, %v804
      %v821 = vadd.f32 %v703, %v805
      %v822 = vadd.f32 %v704, %v806
      %s823 = sadd.s32 %s294, 14
      %s824 = sld [smem:[#allocation2 + %s823]]
      %v825 = vstv %s824
      %v826 = vmul.f32 %v825, %v772
      %v827 = vmul.f32 %v825, %v773
      %v828 = vmul.f32 %v825, %v774
      %v829 = vmul.f32 %v825, %v775
      %v830 = vmul.f32 %v825, %v776
      %v831 = vmul.f32 %v825, %v777
      %v832 = vmul.f32 %v825, %v778
      %v833 = vmul.f32 %v825, %v779
      %v834 = vmul.f32 %v825, %v780
      %v835 = vmul.f32 %v825, %v781
      %v836 = vmul.f32 %v825, %v782
      %v837 = vmul.f32 %v825, %v783
      %v838 = vmul.f32 %v825, %v784
      %v839 = vmul.f32 %v825, %v785
      %v840 = vmul.f32 %v825, %v786
      %v841 = vmul.f32 %v825, %v787
      %v842 = vadd.f32 %v724, %v826
      %v843 = vadd.f32 %v725, %v827
      %v844 = vadd.f32 %v726, %v828
      %v845 = vadd.f32 %v727, %v829
      %v846 = vadd.f32 %v728, %v830
      %v847 = vadd.f32 %v729, %v831
      %v848 = vadd.f32 %v730, %v832
      %v849 = vadd.f32 %v731, %v833
      %v850 = vadd.f32 %v732, %v834
      %v851 = vadd.f32 %v733, %v835
      %v852 = vadd.f32 %v734, %v836
      %v853 = vadd.f32 %v735, %v837
      %v854 = vadd.f32 %v736, %v838
      %v855 = vadd.f32 %v737, %v839
      %v856 = vadd.f32 %v738, %v840
      %v857 = vadd.f32 %v739, %v841
      %v858 = vrot.slane %v181, 1
      %v859 = vrot.slane %v182, 1
      %v860 = vrot.slane %v183, 1
      %v861 = vrot.slane %v184, 1
      %v862 = vrot.slane %v185, 1
      %v863 = vrot.slane %v186, 1
      %v864 = vrot.slane %v187, 1
      %v865 = vrot.slane %v188, 1
      %v866 = vrot.slane %v189, 1
      %v867 = vrot.slane %v190, 1
      %v868 = vrot.slane %v191, 1
      %v869 = vrot.slane %v192, 1
      %v870 = vrot.slane %v193, 1
      %v871 = vrot.slane %v194, 1
      %v872 = vrot.slane %v195, 1
      %v873 = vrot.slane %v196, 1
      %vm874 = vcmp.lt.s32.totalorder %v51, 7
      %v875 = vsel %vm874, %v872, %v873
      %v876 = vsel %vm874, %v871, %v872
      %v877 = vsel %vm874, %v870, %v871
      %v878 = vsel %vm874, %v869, %v870
      %v879 = vsel %vm874, %v868, %v869
      %v880 = vsel %vm874, %v867, %v868
      %v881 = vsel %vm874, %v866, %v867
      %v882 = vsel %vm874, %v865, %v866
      %v883 = vsel %vm874, %v864, %v865
      %v884 = vsel %vm874, %v863, %v864
      %v885 = vsel %vm874, %v862, %v863
      %v886 = vsel %vm874, %v861, %v862
      %v887 = vsel %vm874, %v860, %v861
      %v888 = vsel %vm874, %v859, %v860
      %v889 = vsel %vm874, %v858, %v859
      %v890 = vsel %vm874, %v873, %v858
      %v891 = vmul.f32 %v889, %v149
      %v892 = vmul.f32 %v888, %v150
      %v893 = vmul.f32 %v887, %v151
      %v894 = vmul.f32 %v886, %v152
      %v895 = vmul.f32 %v885, %v153
      %v896 = vmul.f32 %v884, %v154
      %v897 = vmul.f32 %v883, %v155
      %v898 = vmul.f32 %v882, %v156
      %v899 = vmul.f32 %v881, %v157
      %v900 = vmul.f32 %v880, %v158
      %v901 = vmul.f32 %v879, %v159
      %v902 = vmul.f32 %v878, %v160
      %v903 = vmul.f32 %v877, %v161
      %v904 = vmul.f32 %v876, %v162
      %v905 = vmul.f32 %v875, %v163
      %v906 = vmul.f32 %v890, %v164
      %907 = vrot.lane.b32.xlu0 %v891, 1
      %v908 = vpop.permute.xlu0 %907
      %909 = vrot.lane.b32.xlu0 %v892, 1
      %v910 = vpop.permute.xlu0 %909
      %911 = vrot.lane.b32.xlu0 %v893, 1
      %v912 = vpop.permute.xlu0 %911
      %913 = vrot.lane.b32.xlu0 %v894, 1
      %v914 = vpop.permute.xlu0 %913
      %915 = vrot.lane.b32.xlu0 %v895, 1
      %v916 = vpop.permute.xlu0 %915
      %917 = vrot.lane.b32.xlu0 %v896, 1
      %v918 = vpop.permute.xlu0 %917
      %919 = vrot.lane.b32.xlu0 %v897, 1
      %v920 = vpop.permute.xlu0 %919
      %921 = vrot.lane.b32.xlu0 %v898, 1
      %v922 = vpop.permute.xlu0 %921
      %923 = vrot.lane.b32.xlu0 %v899, 1
      %v924 = vpop.permute.xlu0 %923
      %925 = vrot.lane.b32.xlu0 %v900, 1
      %v926 = vpop.permute.xlu0 %925
      %927 = vrot.lane.b32.xlu0 %v901, 1
      %v928 = vpop.permute.xlu0 %927
      %929 = vrot.lane.b32.xlu0 %v902, 1
      %v930 = vpop.permute.xlu0 %929
      %931 = vrot.lane.b32.xlu0 %v903, 1
      %v932 = vpop.permute.xlu0 %931
      %933 = vrot.lane.b32.xlu0 %v904, 1
      %v934 = vpop.permute.xlu0 %933
      %935 = vrot.lane.b32.xlu0 %v905, 1
      %v936 = vpop.permute.xlu0 %935
      %937 = vrot.lane.b32.xlu0 %v906, 1
      %v938 = vpop.permute.xlu0 %937
      %v939 = vmul.f32 %v908, %v167
      %v940 = vmul.f32 %v910, %v167
      %v941 = vmul.f32 %v912, %v167
      %v942 = vmul.f32 %v914, %v167
      %v943 = vmul.f32 %v916, %v167
      %v944 = vmul.f32 %v918, %v167
      %v945 = vmul.f32 %v920, %v167
      %v946 = vmul.f32 %v922, %v167
      %v947 = vmul.f32 %v924, %v167
      %v948 = vmul.f32 %v926, %v167
      %v949 = vmul.f32 %v928, %v167
      %v950 = vmul.f32 %v930, %v167
      %v951 = vmul.f32 %v932, %v167
      %v952 = vmul.f32 %v934, %v167
      %v953 = vmul.f32 %v936, %v167
      %v954 = vmul.f32 %v938, %v167
      %s955 = sadd.s32 %s294, 6
      %s956 = sld [smem:[#allocation2 + %s955]]
      %v957 = vstv %s956
      %v958 = vmul.f32 %v957, %v939
      %v959 = vmul.f32 %v957, %v940
      %v960 = vmul.f32 %v957, %v941
      %v961 = vmul.f32 %v957, %v942
      %v962 = vmul.f32 %v957, %v943
      %v963 = vmul.f32 %v957, %v944
      %v964 = vmul.f32 %v957, %v945
      %v965 = vmul.f32 %v957, %v946
      %v966 = vmul.f32 %v957, %v947
      %v967 = vmul.f32 %v957, %v948
      %v968 = vmul.f32 %v957, %v949
      %v969 = vmul.f32 %v957, %v950
      %v970 = vmul.f32 %v957, %v951
      %v971 = vmul.f32 %v957, %v952
      %v972 = vmul.f32 %v957, %v953
      %v973 = vmul.f32 %v957, %v954
      %v974 = vadd.f32 %v807, %v958
      %v975 = vadd.f32 %v808, %v959
      %v976 = vadd.f32 %v809, %v960
      %v977 = vadd.f32 %v810, %v961
      %v978 = vadd.f32 %v811, %v962
      %v979 = vadd.f32 %v812, %v963
      %v980 = vadd.f32 %v813, %v964
      %v981 = vadd.f32 %v814, %v965
      %v982 = vadd.f32 %v815, %v966
      %v983 = vadd.f32 %v816, %v967
      %v984 = vadd.f32 %v817, %v968
      %v985 = vadd.f32 %v818, %v969
      %v986 = vadd.f32 %v819, %v970
      %v987 = vadd.f32 %v820, %v971
      %v988 = vadd.f32 %v821, %v972
      %v989 = vadd.f32 %v822, %v973
      %s990 = sadd.s32 %s294, 15
      %s991 = sld [smem:[#allocation2 + %s990]]
      %v992 = vstv %s991
      %v993 = vmul.f32 %v992, %v939
      %v994 = vmul.f32 %v992, %v940
      %v995 = vmul.f32 %v992, %v941
      %v996 = vmul.f32 %v992, %v942
      %v997 = vmul.f32 %v992, %v943
      %v998 = vmul.f32 %v992, %v944
      %v999 = vmul.f32 %v992, %v945
      %v1000 = vmul.f32 %v992, %v946
      %v1001 = vmul.f32 %v992, %v947
      %v1002 = vmul.f32 %v992, %v948
      %v1003 = vmul.f32 %v992, %v949
      %v1004 = vmul.f32 %v992, %v950
      %v1005 = vmul.f32 %v992, %v951
      %v1006 = vmul.f32 %v992, %v952
      %v1007 = vmul.f32 %v992, %v953
      %v1008 = vmul.f32 %v992, %v954
      %v1009 = vadd.f32 %v842, %v993
      %v1010 = vadd.f32 %v843, %v994
      %v1011 = vadd.f32 %v844, %v995
      %v1012 = vadd.f32 %v845, %v996
      %v1013 = vadd.f32 %v846, %v997
      %v1014 = vadd.f32 %v847, %v998
      %v1015 = vadd.f32 %v848, %v999
      %v1016 = vadd.f32 %v849, %v1000
      %v1017 = vadd.f32 %v850, %v1001
      %v1018 = vadd.f32 %v851, %v1002
      %v1019 = vadd.f32 %v852, %v1003
      %v1020 = vadd.f32 %v853, %v1004
      %v1021 = vadd.f32 %v854, %v1005
      %v1022 = vadd.f32 %v855, %v1006
      %v1023 = vadd.f32 %v856, %v1007
      %v1024 = vadd.f32 %v857, %v1008
      %s1025 = sadd.s32 %s294, 7
      %s1026 = sld [smem:[#allocation2 + %s1025]]
      %v1027 = vstv %s1026
      %v1028 = vmul.f32 %v1027, %v891
      %v1029 = vmul.f32 %v1027, %v892
      %v1030 = vmul.f32 %v1027, %v893
      %v1031 = vmul.f32 %v1027, %v894
      %v1032 = vmul.f32 %v1027, %v895
      %v1033 = vmul.f32 %v1027, %v896
      %v1034 = vmul.f32 %v1027, %v897
      %v1035 = vmul.f32 %v1027, %v898
      %v1036 = vmul.f32 %v1027, %v899
      %v1037 = vmul.f32 %v1027, %v900
      %v1038 = vmul.f32 %v1027, %v901
      %v1039 = vmul.f32 %v1027, %v902
      %v1040 = vmul.f32 %v1027, %v903
      %v1041 = vmul.f32 %v1027, %v904
      %v1042 = vmul.f32 %v1027, %v905
      %v1043 = vmul.f32 %v1027, %v906
      %v1044 = vadd.f32 %v974, %v1028
      %v1045 = vadd.f32 %v975, %v1029
      %v1046 = vadd.f32 %v976, %v1030
      %v1047 = vadd.f32 %v977, %v1031
      %v1048 = vadd.f32 %v978, %v1032
      %v1049 = vadd.f32 %v979, %v1033
      %v1050 = vadd.f32 %v980, %v1034
      %v1051 = vadd.f32 %v981, %v1035
      %v1052 = vadd.f32 %v982, %v1036
      %v1053 = vadd.f32 %v983, %v1037
      %v1054 = vadd.f32 %v984, %v1038
      %v1055 = vadd.f32 %v985, %v1039
      %v1056 = vadd.f32 %v986, %v1040
      %v1057 = vadd.f32 %v987, %v1041
      %v1058 = vadd.f32 %v988, %v1042
      %v1059 = vadd.f32 %v989, %v1043
      %s1060 = sadd.s32 %s294, 16
      %s1061 = sld [smem:[#allocation2 + %s1060]]
      %v1062 = vstv %s1061
      %v1063 = vmul.f32 %v1062, %v891
      %v1064 = vmul.f32 %v1062, %v892
      %v1065 = vmul.f32 %v1062, %v893
      %v1066 = vmul.f32 %v1062, %v894
      %v1067 = vmul.f32 %v1062, %v895
      %v1068 = vmul.f32 %v1062, %v896
      %v1069 = vmul.f32 %v1062, %v897
      %v1070 = vmul.f32 %v1062, %v898
      %v1071 = vmul.f32 %v1062, %v899
      %v1072 = vmul.f32 %v1062, %v900
      %v1073 = vmul.f32 %v1062, %v901
      %v1074 = vmul.f32 %v1062, %v902
      %v1075 = vmul.f32 %v1062, %v903
      %v1076 = vmul.f32 %v1062, %v904
      %v1077 = vmul.f32 %v1062, %v905
      %v1078 = vmul.f32 %v1062, %v906
      %v1079 = vadd.f32 %v1009, %v1063
      %v1080 = vadd.f32 %v1010, %v1064
      %v1081 = vadd.f32 %v1011, %v1065
      %v1082 = vadd.f32 %v1012, %v1066
      %v1083 = vadd.f32 %v1013, %v1067
      %v1084 = vadd.f32 %v1014, %v1068
      %v1085 = vadd.f32 %v1015, %v1069
      %v1086 = vadd.f32 %v1016, %v1070
      %v1087 = vadd.f32 %v1017, %v1071
      %v1088 = vadd.f32 %v1018, %v1072
      %v1089 = vadd.f32 %v1019, %v1073
      %v1090 = vadd.f32 %v1020, %v1074
      %v1091 = vadd.f32 %v1021, %v1075
      %v1092 = vadd.f32 %v1022, %v1076
      %v1093 = vadd.f32 %v1023, %v1077
      %v1094 = vadd.f32 %v1024, %v1078
      %1095 = vrot.lane.b32.xlu0 %v891, 127
      %v1096 = vpop.permute.xlu0 %1095
      %1097 = vrot.lane.b32.xlu0 %v892, 127
      %v1098 = vpop.permute.xlu0 %1097
      %1099 = vrot.lane.b32.xlu0 %v893, 127
      %v1100 = vpop.permute.xlu0 %1099
      %1101 = vrot.lane.b32.xlu0 %v894, 127
      %v1102 = vpop.permute.xlu0 %1101
      %1103 = vrot.lane.b32.xlu0 %v895, 127
      %v1104 = vpop.permute.xlu0 %1103
      %1105 = vrot.lane.b32.xlu0 %v896, 127
      %v1106 = vpop.permute.xlu0 %1105
      %1107 = vrot.lane.b32.xlu0 %v897, 127
      %v1108 = vpop.permute.xlu0 %1107
      %1109 = vrot.lane.b32.xlu0 %v898, 127
      %v1110 = vpop.permute.xlu0 %1109
      %1111 = vrot.lane.b32.xlu0 %v899, 127
      %v1112 = vpop.permute.xlu0 %1111
      %1113 = vrot.lane.b32.xlu0 %v900, 127
      %v1114 = vpop.permute.xlu0 %1113
      %1115 = vrot.lane.b32.xlu0 %v901, 127
      %v1116 = vpop.permute.xlu0 %1115
      %1117 = vrot.lane.b32.xlu0 %v902, 127
      %v1118 = vpop.permute.xlu0 %1117
      %1119 = vrot.lane.b32.xlu0 %v903, 127
      %v1120 = vpop.permute.xlu0 %1119
      %1121 = vrot.lane.b32.xlu0 %v904, 127
      %v1122 = vpop.permute.xlu0 %1121
      %1123 = vrot.lane.b32.xlu0 %v905, 127
      %v1124 = vpop.permute.xlu0 %1123
      %1125 = vrot.lane.b32.xlu0 %v906, 127
      %v1126 = vpop.permute.xlu0 %1125
      %v1127 = vmul.f32 %v1096, %v170
      %v1128 = vmul.f32 %v1098, %v170
      %v1129 = vmul.f32 %v1100, %v170
      %v1130 = vmul.f32 %v1102, %v170
      %v1131 = vmul.f32 %v1104, %v170
      %v1132 = vmul.f32 %v1106, %v170
      %v1133 = vmul.f32 %v1108, %v170
      %v1134 = vmul.f32 %v1110, %v170
      %v1135 = vmul.f32 %v1112, %v170
      %v1136 = vmul.f32 %v1114, %v170
      %v1137 = vmul.f32 %v1116, %v170
      %v1138 = vmul.f32 %v1118, %v170
      %v1139 = vmul.f32 %v1120, %v170
      %v1140 = vmul.f32 %v1122, %v170
      %v1141 = vmul.f32 %v1124, %v170
      %v1142 = vmul.f32 %v1126, %v170
      %s1143 = sadd.s32 %s294, 8
      %s1144 = sld [smem:[#allocation2 + %s1143]]
      %v1145 = vstv %s1144
      %v1146 = vmul.f32 %v1145, %v1127
      %v1147 = vmul.f32 %v1145, %v1128
      %v1148 = vmul.f32 %v1145, %v1129
      %v1149 = vmul.f32 %v1145, %v1130
      %v1150 = vmul.f32 %v1145, %v1131
      %v1151 = vmul.f32 %v1145, %v1132
      %v1152 = vmul.f32 %v1145, %v1133
      %v1153 = vmul.f32 %v1145, %v1134
      %v1154 = vmul.f32 %v1145, %v1135
      %v1155 = vmul.f32 %v1145, %v1136
      %v1156 = vmul.f32 %v1145, %v1137
      %v1157 = vmul.f32 %v1145, %v1138
      %v1158 = vmul.f32 %v1145, %v1139
      %v1159 = vmul.f32 %v1145, %v1140
      %v1160 = vmul.f32 %v1145, %v1141
      %v1161 = vmul.f32 %v1145, %v1142
      %v1162 = vadd.f32 %v1044, %v1146
      %v1163 = vadd.f32 %v1045, %v1147
      %v1164 = vadd.f32 %v1046, %v1148
      %v1165 = vadd.f32 %v1047, %v1149
      %v1166 = vadd.f32 %v1048, %v1150
      %v1167 = vadd.f32 %v1049, %v1151
      %v1168 = vadd.f32 %v1050, %v1152
      %v1169 = vadd.f32 %v1051, %v1153
      %v1170 = vadd.f32 %v1052, %v1154
      %v1171 = vadd.f32 %v1053, %v1155
      %v1172 = vadd.f32 %v1054, %v1156
      %v1173 = vadd.f32 %v1055, %v1157
      %v1174 = vadd.f32 %v1056, %v1158
      %v1175 = vadd.f32 %v1057, %v1159
      %v1176 = vadd.f32 %v1058, %v1160
      %v1177 = vadd.f32 %v1059, %v1161
      %s1178 = sadd.s32 %s294, 17
      %s1179 = sld [smem:[#allocation2 + %s1178]]
      %v1180 = vstv %s1179
      %v1181 = vmul.f32 %v1180, %v1127
      %v1182 = vmul.f32 %v1180, %v1128
      %v1183 = vmul.f32 %v1180, %v1129
      %v1184 = vmul.f32 %v1180, %v1130
      %v1185 = vmul.f32 %v1180, %v1131
      %v1186 = vmul.f32 %v1180, %v1132
      %v1187 = vmul.f32 %v1180, %v1133
      %v1188 = vmul.f32 %v1180, %v1134
      %v1189 = vmul.f32 %v1180, %v1135
      %v1190 = vmul.f32 %v1180, %v1136
      %v1191 = vmul.f32 %v1180, %v1137
      %v1192 = vmul.f32 %v1180, %v1138
      %v1193 = vmul.f32 %v1180, %v1139
      %v1194 = vmul.f32 %v1180, %v1140
      %v1195 = vmul.f32 %v1180, %v1141
      %v1196 = vmul.f32 %v1180, %v1142
      %v1197 = vadd.f32 %v1079, %v1181
      %v1198 = vadd.f32 %v1080, %v1182
      %v1199 = vadd.f32 %v1081, %v1183
      %v1200 = vadd.f32 %v1082, %v1184
      %v1201 = vadd.f32 %v1083, %v1185
      %v1202 = vadd.f32 %v1084, %v1186
      %v1203 = vadd.f32 %v1085, %v1187
      %v1204 = vadd.f32 %v1086, %v1188
      %v1205 = vadd.f32 %v1087, %v1189
      %v1206 = vadd.f32 %v1088, %v1190
      %v1207 = vadd.f32 %v1089, %v1191
      %v1208 = vadd.f32 %v1090, %v1192
      %v1209 = vadd.f32 %v1091, %v1193
      %v1210 = vadd.f32 %v1092, %v1194
      %v1211 = vadd.f32 %v1093, %v1195
      %v1212 = vadd.f32 %v1094, %v1196
      %s1213 = smul.u32 %s178, 2
      %s1214 = sld [smem:[#allocation6 + %s1213]]
      %s1215 = sadd.f32 %s1214, 3.0
      %v1216 = vstv %s1215
      %v1217 = vadd.f32 %v1162, %v1216
      %v1218 = vadd.f32 %v1163, %v1216
      %v1219 = vadd.f32 %v1164, %v1216
      %v1220 = vadd.f32 %v1165, %v1216
      %v1221 = vadd.f32 %v1166, %v1216
      %v1222 = vadd.f32 %v1167, %v1216
      %v1223 = vadd.f32 %v1168, %v1216
      %v1224 = vadd.f32 %v1169, %v1216
      %v1225 = vadd.f32 %v1170, %v1216
      %v1226 = vadd.f32 %v1171, %v1216
      %v1227 = vadd.f32 %v1172, %v1216
      %v1228 = vadd.f32 %v1173, %v1216
      %v1229 = vadd.f32 %v1174, %v1216
      %v1230 = vadd.f32 %v1175, %v1216
      %v1231 = vadd.f32 %v1176, %v1216
      %v1232 = vadd.f32 %v1177, %v1216
      %v1233 = vmax.f32 %v1217, 0.0
      %v1234 = vmax.f32 %v1218, 0.0
      %v1235 = vmax.f32 %v1219, 0.0
      %v1236 = vmax.f32 %v1220, 0.0
      %v1237 = vmax.f32 %v1221, 0.0
      %v1238 = vmax.f32 %v1222, 0.0
      %v1239 = vmax.f32 %v1223, 0.0
      %v1240 = vmax.f32 %v1224, 0.0
      %v1241 = vmax.f32 %v1225, 0.0
      %v1242 = vmax.f32 %v1226, 0.0
      %v1243 = vmax.f32 %v1227, 0.0
      %v1244 = vmax.f32 %v1228, 0.0
      %v1245 = vmax.f32 %v1229, 0.0
      %v1246 = vmax.f32 %v1230, 0.0
      %v1247 = vmax.f32 %v1231, 0.0
      %v1248 = vmax.f32 %v1232, 0.0
      %v1249 = vmin.f32 %v1233, 6.0
      %v1250 = vmin.f32 %v1234, 6.0
      %v1251 = vmin.f32 %v1235, 6.0
      %v1252 = vmin.f32 %v1236, 6.0
      %v1253 = vmin.f32 %v1237, 6.0
      %v1254 = vmin.f32 %v1238, 6.0
      %v1255 = vmin.f32 %v1239, 6.0
      %v1256 = vmin.f32 %v1240, 6.0
      %v1257 = vmin.f32 %v1241, 6.0
      %v1258 = vmin.f32 %v1242, 6.0
      %v1259 = vmin.f32 %v1243, 6.0
      %v1260 = vmin.f32 %v1244, 6.0
      %v1261 = vmin.f32 %v1245, 6.0
      %v1262 = vmin.f32 %v1246, 6.0
      %v1263 = vmin.f32 %v1247, 6.0
      %v1264 = vmin.f32 %v1248, 6.0
      %v1265 = vmul.f32 %v1249, 0.16666667
      %v1266 = vmul.f32 %v1250, 0.16666667
      %v1267 = vmul.f32 %v1251, 0.16666667
      %v1268 = vmul.f32 %v1252, 0.16666667
      %v1269 = vmul.f32 %v1253, 0.16666667
      %v1270 = vmul.f32 %v1254, 0.16666667
      %v1271 = vmul.f32 %v1255, 0.16666667
      %v1272 = vmul.f32 %v1256, 0.16666667
      %v1273 = vmul.f32 %v1257, 0.16666667
      %v1274 = vmul.f32 %v1258, 0.16666667
      %v1275 = vmul.f32 %v1259, 0.16666667
      %v1276 = vmul.f32 %v1260, 0.16666667
      %v1277 = vmul.f32 %v1261, 0.16666667
      %v1278 = vmul.f32 %v1262, 0.16666667
      %v1279 = vmul.f32 %v1263, 0.16666667
      %v1280 = vmul.f32 %v1264, 0.16666667
      %s1281 = smul.u32 %s172, 2
      %s1282 = smul.u32 %s1281, 128
      %s1283 = scalar_lea.vmem [#allocation9], %s1282
      %1284 = vst [vmem:[%s1283] sm:$0xff] %v1265
      %1285 = vst [vmem:[%s1283 + $0x8] sm:$0xff] %v1266
      %1286 = vst [vmem:[%s1283 + $0x10] sm:$0xff] %v1267
      %1287 = vst [vmem:[%s1283 + $0x18] sm:$0xff] %v1268
      %1288 = vst [vmem:[%s1283 + $0x20] sm:$0xff] %v1269
      %1289 = vst [vmem:[%s1283 + $0x28] sm:$0xff] %v1270
      %1290 = vst [vmem:[%s1283 + $0x30] sm:$0xff] %v1271
      %1291 = vst [vmem:[%s1283 + $0x38] sm:$0xff] %v1272
      %1292 = vst [vmem:[%s1283 + $0x40] sm:$0xff] %v1273
      %1293 = vst [vmem:[%s1283 + $0x48] sm:$0xff] %v1274
      %1294 = vst [vmem:[%s1283 + $0x50] sm:$0xff] %v1275
      %1295 = vst [vmem:[%s1283 + $0x58] sm:$0xff] %v1276
      %1296 = vst [vmem:[%s1283 + $0x60] sm:$0xff] %v1277
      %1297 = vst [vmem:[%s1283 + $0x68] sm:$0xff] %v1278
      %1298 = vst [vmem:[%s1283 + $0x70] sm:$0xff] %v1279
      %1299 = vst [vmem:[%s1283 + $0x78] sm:$0xff] %v1280
      %s1300 = sadd.s32 %s1213, 1
      %s1301 = sld [smem:[#allocation6 + %s1300]]
      %s1302 = sadd.f32 %s1301, 3.0
      %v1303 = vstv %s1302
      %v1304 = vadd.f32 %v1197, %v1303
      %v1305 = vadd.f32 %v1198, %v1303
      %v1306 = vadd.f32 %v1199, %v1303
      %v1307 = vadd.f32 %v1200, %v1303
      %v1308 = vadd.f32 %v1201, %v1303
      %v1309 = vadd.f32 %v1202, %v1303
      %v1310 = vadd.f32 %v1203, %v1303
      %v1311 = vadd.f32 %v1204, %v1303
      %v1312 = vadd.f32 %v1205, %v1303
      %v1313 = vadd.f32 %v1206, %v1303
      %v1314 = vadd.f32 %v1207, %v1303
      %v1315 = vadd.f32 %v1208, %v1303
      %v1316 = vadd.f32 %v1209, %v1303
      %v1317 = vadd.f32 %v1210, %v1303
      %v1318 = vadd.f32 %v1211, %v1303
      %v1319 = vadd.f32 %v1212, %v1303
      %v1320 = vmax.f32 %v1304, 0.0
      %v1321 = vmax.f32 %v1305, 0.0
      %v1322 = vmax.f32 %v1306, 0.0
      %v1323 = vmax.f32 %v1307, 0.0
      %v1324 = vmax.f32 %v1308, 0.0
      %v1325 = vmax.f32 %v1309, 0.0
      %v1326 = vmax.f32 %v1310, 0.0
      %v1327 = vmax.f32 %v1311, 0.0
      %v1328 = vmax.f32 %v1312, 0.0
      %v1329 = vmax.f32 %v1313, 0.0
      %v1330 = vmax.f32 %v1314, 0.0
      %v1331 = vmax.f32 %v1315, 0.0
      %v1332 = vmax.f32 %v1316, 0.0
      %v1333 = vmax.f32 %v1317, 0.0
      %v1334 = vmax.f32 %v1318, 0.0
      %v1335 = vmax.f32 %v1319, 0.0
      %v1336 = vmin.f32 %v1320, 6.0
      %v1337 = vmin.f32 %v1321, 6.0
      %v1338 = vmin.f32 %v1322, 6.0
      %v1339 = vmin.f32 %v1323, 6.0
      %v1340 = vmin.f32 %v1324, 6.0
      %v1341 = vmin.f32 %v1325, 6.0
      %v1342 = vmin.f32 %v1326, 6.0
      %v1343 = vmin.f32 %v1327, 6.0
      %v1344 = vmin.f32 %v1328, 6.0
      %v1345 = vmin.f32 %v1329, 6.0
      %v1346 = vmin.f32 %v1330, 6.0
      %v1347 = vmin.f32 %v1331, 6.0
      %v1348 = vmin.f32 %v1332, 6.0
      %v1349 = vmin.f32 %v1333, 6.0
      %v1350 = vmin.f32 %v1334, 6.0
      %v1351 = vmin.f32 %v1335, 6.0
      %v1352 = vmul.f32 %v1336, 0.16666667
      %v1353 = vmul.f32 %v1337, 0.16666667
      %v1354 = vmul.f32 %v1338, 0.16666667
      %v1355 = vmul.f32 %v1339, 0.16666667
      %v1356 = vmul.f32 %v1340, 0.16666667
      %v1357 = vmul.f32 %v1341, 0.16666667
      %v1358 = vmul.f32 %v1342, 0.16666667
      %v1359 = vmul.f32 %v1343, 0.16666667
      %v1360 = vmul.f32 %v1344, 0.16666667
      %v1361 = vmul.f32 %v1345, 0.16666667
      %v1362 = vmul.f32 %v1346, 0.16666667
      %v1363 = vmul.f32 %v1347, 0.16666667
      %v1364 = vmul.f32 %v1348, 0.16666667
      %v1365 = vmul.f32 %v1349, 0.16666667
      %v1366 = vmul.f32 %v1350, 0.16666667
      %v1367 = vmul.f32 %v1351, 0.16666667
      %s1368 = sadd.s32 %s1281, 1
      %s1369 = smul.u32 %s1368, 128
      %s1370 = scalar_lea.vmem [#allocation9], %s1369
      %1371 = vst [vmem:[%s1370] sm:$0xff] %v1352
      %1372 = vst [vmem:[%s1370 + $0x8] sm:$0xff] %v1353
      %1373 = vst [vmem:[%s1370 + $0x10] sm:$0xff] %v1354
      %1374 = vst [vmem:[%s1370 + $0x18] sm:$0xff] %v1355
      %1375 = vst [vmem:[%s1370 + $0x20] sm:$0xff] %v1356
      %1376 = vst [vmem:[%s1370 + $0x28] sm:$0xff] %v1357
      %1377 = vst [vmem:[%s1370 + $0x30] sm:$0xff] %v1358
      %1378 = vst [vmem:[%s1370 + $0x38] sm:$0xff] %v1359
      %1379 = vst [vmem:[%s1370 + $0x40] sm:$0xff] %v1360
      %1380 = vst [vmem:[%s1370 + $0x48] sm:$0xff] %v1361
      %1381 = vst [vmem:[%s1370 + $0x50] sm:$0xff] %v1362
      %1382 = vst [vmem:[%s1370 + $0x58] sm:$0xff] %v1363
      %1383 = vst [vmem:[%s1370 + $0x60] sm:$0xff] %v1364
      %1384 = vst [vmem:[%s1370 + $0x68] sm:$0xff] %v1365
      %1385 = vst [vmem:[%s1370 + $0x70] sm:$0xff] %v1366
      %1386 = vst [vmem:[%s1370 + $0x78] sm:$0xff] %v1367
    $region30: #{tpu_custom_call.1} parent=1 // loop_footer
      %s176 = sadd.s32 1, %s172
    $region31: #{tpu_custom_call.1} parent=1 // loop_footer_branch
      %171 = sbr.rel target = $region27
    $region32: #{tpu_custom_call.1} parent=1 // loop_exit
      _
    // Predicated region
    $region33: #{tpu_custom_call.1} parent=1 // pred_check
      _
    $region34: #{tpu_custom_call.1} parent=1 // pred_check_branch
      %1388 = sbr.rel (0) target = $region36
    $region35: #{tpu_custom_call.1} parent=1 // pred_region
      %s1390 = ssub.s32 36864, 36864
      %1391 = vsyncadd [#allocation4], %s1390
      %s1392 = sshll.u32 [#allocation9], 4
      %s1393 = int_to_ptr.vmem [resolvable:$true] %s1392
      %1398 = dma.vmem_to_hbm [thread:$0]  %s1393, 36864, %s3, [#allocation4], 128, 128, 8
    $region36: #{tpu_custom_call.1} parent=1 // pred_fallthru
      _
    // Predicated region
    $region37: #{tpu_custom_call.1} parent=1 // pred_check
      _
    $region38: #{tpu_custom_call.1} parent=1 // pred_check_branch
      %1400 = sbr.rel (0) target = $region40
    $region39: #{tpu_custom_call.1} parent=1 // pred_region
      %1401 = dma.done [#allocation4], 36864
    $region40: #{tpu_custom_call.1} parent=1 // pred_fallthru
      _
    %1402 = vsyncpa [#allocation3], 1
    %1403 = vsyncpa [#allocation4], 1
    %1404 = vsyncpa [#allocation5], 1
    %1405 = vsyncpa [#allocation7], 1

</llo_original>
